<compile_context>
chip_gen: v6e
topology: v6e:2x2x1
jax: 0.10.0
libtpu: 0.0.40
codegen_flags: <defaults>
</compile_context>

<pallas_src>
import functools

import jax
import jax.numpy as jnp
from jax import lax
from jax.experimental import pallas as pl
from jax.experimental.pallas import tpu as pltpu

LN_EPS = 1e-12  # TF-style LayerNorm epsilon used by the PyTorch module (eps=1e-12)


def _layernorm_f32(x, w, b):
    # TF-style LayerNorm (epsilon inside the sqrt), computed in float32.
    u = jnp.mean(x, axis=-1, keepdims=True)
    s = jnp.mean((x - u) ** 2, axis=-1, keepdims=True)
    return w * ((x - u) * lax.rsqrt(s + LN_EPS)) + b


def _block_kernel(
    x_ref,                                # (Bt, L, E)   f32
    ln1_w_ref, ln1_b_ref,                 # (1, E)       f32
    wqkv_ref,                             # (E, 3E)      bf16 (q columns pre-scaled)
    bqkv_ref,                             # (1, 3E)      f32  (q bias pre-scaled)
    wo_ref,                               # (E, E)       bf16
    out_b_ref,                            # (1, E)       f32
    ln2_w_ref, ln2_b_ref,                 # (1, E)       f32
    fc_w_ref, fc_b_ref,                   # (E, 4E), (1, 4E)   bf16 / f32
    proj_w_ref, proj_b_ref,               # (4E, E), (1, E)    bf16 / f32
    o_ref,                                # (Bt, L, E)   f32
    *, n_head,
):
    bt, L, E = o_ref.shape
    hd = E // n_head

    x = x_ref[...].reshape(bt * L, E)                                   # f32

    # ------------------------------ attention ------------------------------
    xl = _layernorm_f32(x, ln1_w_ref[...], ln1_b_ref[...]).astype(jnp.bfloat16)

    # Single fused, lane-dense QKV projection (MXU, bf16 in / f32 acc).
    qkv = jnp.dot(xl, wqkv_ref[...],
                  preferred_element_type=jnp.float32) + bqkv_ref[...]   # (Bt*L, 3E)

    head_ctx = []
    for h in range(n_head):                      # light unroll: only small bf16 lives
        lo = h * hd
        qh = qkv[:, lo:lo + hd].astype(jnp.bfloat16).reshape(bt, L, hd)
        kh = qkv[:, E + lo:E + lo + hd].astype(jnp.bfloat16).reshape(bt, L, hd)
        vh = qkv[:, 2 * E + lo:2 * E + lo + hd].astype(jnp.bfloat16).reshape(bt, L, hd)

        s = jnp.einsum('bqd,bkd->bqk', qh, kh,
                       preferred_element_type=jnp.float32)              # (Bt, L, L) f32
        s = s - jnp.max(s, axis=-1, keepdims=True)
        p = jnp.exp(s)
        p = p / jnp.sum(p, axis=-1, keepdims=True)                      # exact softmax

        oh = jnp.einsum('bqk,bkd->bqd', p.astype(jnp.bfloat16), vh,
                        preferred_element_type=jnp.float32)             # (Bt, L, hd)
        head_ctx.append(oh.reshape(bt * L, hd).astype(jnp.bfloat16))

    ctx = jnp.concatenate(head_ctx, axis=-1)                            # (Bt*L, E) bf16
    # Single full-K output projection (no per-head accumulator passes).
    attn = jnp.dot(ctx, wo_ref[...],
                   preferred_element_type=jnp.float32) + out_b_ref[...]

    y = x + attn                                                        # residual 1 (f32)

    # --------------------------------- MLP ---------------------------------
    xl2 = _layernorm_f32(y, ln2_w_ref[...], ln2_b_ref[...]).astype(jnp.bfloat16)
    h1 = jnp.dot(xl2, fc_w_ref[...],
                 preferred_element_type=jnp.float32) + fc_b_ref[...]    # (Bt*L, 4E) f32
    h1 = h1 * jax.nn.sigmoid(1.702 * h1)                                # QuickGELU (f32)
    h2 = jnp.dot(h1.astype(jnp.bfloat16), proj_w_ref[...],
                 preferred_element_type=jnp.float32) + proj_b_ref[...]

    o_ref[...] = (y + h2).reshape(bt, L, E)                             # residual 2


def prepare_params(params, n_head):
    """One-time weight prep: transpose, fold q-scale into fused QKV, cast to bf16."""
    E = params["ln1_w"].shape[0]
    hd = E // n_head
    scale = 1.0 / float(hd) ** 0.5

    in_w = params["in_proj_weight"].astype(jnp.float32)          # (3E, E), rows = outputs
    in_b = params["in_proj_bias"].astype(jnp.float32)            # (3E,)
    scale_vec = jnp.concatenate([jnp.full((E,), scale, jnp.float32),
                                 jnp.ones((2 * E,), jnp.float32)])
    w_qkv = (in_w * scale_vec[:, None]).T                        # (E, 3E), q cols scaled
    b_qkv = (in_b * scale_vec).reshape(1, 3 * E)

    f32, bf16 = jnp.float32, jnp.bfloat16
    return {
        "ln1_w": params["ln1_w"].reshape(1, E).astype(f32),
        "ln1_b": params["ln1_b"].reshape(1, E).astype(f32),
        "w_qkv": w_qkv.astype(bf16),
        "b_qkv": b_qkv.astype(f32),
        "wo": params["out_proj_weight"].T.astype(bf16),          # (E, E)
        "out_b": params["out_proj_bias"].reshape(1, E).astype(f32),
        "ln2_w": params["ln2_w"].reshape(1, E).astype(f32),
        "ln2_b": params["ln2_b"].reshape(1, E).astype(f32),
        "fc_w": params["c_fc_weight"].T.astype(bf16),            # (E, 4E)
        "fc_b": params["c_fc_bias"].reshape(1, 4 * E).astype(f32),
        "proj_w": params["c_proj_weight"].T.astype(bf16),        # (4E, E)
        "proj_b": params["c_proj_bias"].reshape(1, E).astype(f32),
    }


def residual_attention_block(x, prepped, n_head, *, block_batch=None):
    """x: (L, N, E) float32. Returns (L, N, E) float32."""
    L, N, E = x.shape
    xb = jnp.transpose(x, (1, 0, 2)).astype(jnp.float32)         # (N, L, E)

    # Batch block: largest divisor of N keeping bt*L (the matmul M dim) <= ~1024 rows.
    if block_batch is None:
        max_rows = 1024
        block_batch = 1
        for b in range(N, 0, -1):
            if N % b == 0 and b * L <= max_rows:
                block_batch = b
                break
    bt = block_batch
    assert N % bt == 0

    p = prepped
    grid = (N // bt,)                                            # single "parallel" axis

    def full_spec(arr):
        nd = arr.ndim
        return pl.BlockSpec(arr.shape, lambda b, _nd=nd: (0,) * _nd)

    in_specs = [
        pl.BlockSpec((bt, L, E), lambda b: (b, 0, 0)),           # x (per batch block)
        full_spec(p["ln1_w"]), full_spec(p["ln1_b"]),
        full_spec(p["w_qkv"]), full_spec(p["b_qkv"]),
        full_spec(p["wo"]), full_spec(p["out_b"]),
        full_spec(p["ln2_w"]), full_spec(p["ln2_b"]),
        full_spec(p["fc_w"]), full_spec(p["fc_b"]),              # resident MLP weights
        full_spec(p["proj_w"]), full_spec(p["proj_b"]),
    ]

    out = pl.pallas_call(
        functools.partial(_block_kernel, n_head=n_head),
        out_shape=jax.ShapeDtypeStruct((N, L, E), jnp.float32),
        grid=grid,
        in_specs=in_specs,
        out_specs=pl.BlockSpec((bt, L, E), lambda b: (b, 0, 0)),
        compiler_params=pltpu.CompilerParams(
            dimension_semantics=("parallel",),
            vmem_limit_bytes=48 * 1024 * 1024,
        ),
    )(xb, p["ln1_w"], p["ln1_b"], p["w_qkv"], p["b_qkv"], p["wo"], p["out_b"],
      p["ln2_w"], p["ln2_b"], p["fc_w"], p["fc_b"], p["proj_w"], p["proj_b"])

    return jnp.transpose(out, (1, 0, 2))                         # (L, N, E)


# ---------------- pure-JAX f32 reference (module semantics) ----------------
def _reference(x, params, n_head):
    L, N, E = x.shape
    hd = E // n_head

    def ln(v, w, b):
        u = v.mean(-1, keepdims=True)
        s = ((v - u) ** 2).mean(-1, keepdims=True)
        return w * ((v - u) / jnp.sqrt(s + LN_EPS)) + b

    def one_batch(xb):                                            # (L, E)
        xl = ln(xb, params["ln1_w"], params["ln1_b"])
        qkv = xl @ params["in_proj_weight"].T + params["in_proj_bias"]
        q, k, v = jnp.split(qkv, 3, axis=-1)
        q = q * (1.0 / float(hd) ** 0.5)
        qh = q.reshape(L, n_head, hd).transpose(1, 0, 2)
        kh = k.reshape(L, n_head, hd).transpose(1, 0, 2)
        vh = v.reshape(L, n_head, hd).transpose(1, 0, 2)
        sc = jnp.einsum("hqd,hkd->hqk", qh, kh)
        p = jax.nn.softmax(sc, axis=-1)
        o = jnp.einsum("hqk,hkd->hqd", p, vh).transpose(1, 0, 2).reshape(L, E)
        attn = o @ params["out_proj_weight"].T + params["out_proj_bias"]
        xb = xb + attn
        xl2 = ln(xb, params["ln2_w"], params["ln2_b"])
        h1 = xl2 @ params["c_fc_weight"].T + params["c_fc_bias"]
        h1 = h1 * jax.nn.sigmoid(1.702 * h1)
        h2 = h1 @ params["c_proj_weight"].T + params["c_proj_bias"]
        return xb + h2

    return jax.vmap(one_batch, in_axes=1, out_axes=1)(x)


if __name__ == "__main__":
    d_model = 32
    n_head = 4
    seq = 8
    batch = 2

    key = jax.random.PRNGKey(0)
    ks = jax.random.split(key, 10)
    scale = 0.02
    params = {
        "ln1_w": jnp.ones((d_model,), jnp.float32),
        "ln1_b": jnp.zeros((d_model,), jnp.float32),
        "in_proj_weight": scale * jax.random.normal(ks[0], (3 * d_model, d_model), jnp.float32),
        "in_proj_bias": scale * jax.random.normal(ks[1], (3 * d_model,), jnp.float32),
        "out_proj_weight": scale * jax.random.normal(ks[2], (d_model, d_model), jnp.float32),
        "out_proj_bias": scale * jax.random.normal(ks[3], (d_model,), jnp.float32),
        "ln2_w": jnp.ones((d_model,), jnp.float32),
        "ln2_b": jnp.zeros((d_model,), jnp.float32),
        "c_fc_weight": scale * jax.random.normal(ks[4], (4 * d_model, d_model), jnp.float32),
        "c_fc_bias": scale * jax.random.normal(ks[5], (4 * d_model,), jnp.float32),
        "c_proj_weight": scale * jax.random.normal(ks[6], (d_model, 4 * d_model), jnp.float32),
        "c_proj_bias": scale * jax.random.normal(ks[7], (d_model,), jnp.float32),
    }

    x = jax.random.normal(ks[8], (seq, batch, d_model), jnp.float32)

    # TODO(synk): attn_mask (default None) and DropPath (>0) are not implemented.
    prepped = prepare_params(params, n_head)        # one-time weight prep
    out = residual_attention_block(x, prepped, n_head)
    out = jax.block_until_ready(out)

    ref = _reference(x, params, n_head)
    assert out.shape == (seq, batch, d_model)
    # bf16 MXU inputs vs f32 reference -> relaxed tolerance.
    assert jnp.allclose(out, ref, atol=1e-2, rtol=1e-2), "mismatch vs reference"

    print("KERNEL_OK")
</pallas_src>

<mosaic_0001>
module attributes {stable_mosaic.version = 11 : i64} {
  func.func @_block_kernel(%arg0: i32, %arg1: memref<2x8x32xf32, #tpu.memory_space<vmem>>, %arg2: memref<1x32xf32, #tpu.memory_space<vmem>>, %arg3: memref<1x32xf32, #tpu.memory_space<vmem>>, %arg4: memref<32x96xbf16, #tpu.memory_space<vmem>>, %arg5: memref<1x96xf32, #tpu.memory_space<vmem>>, %arg6: memref<32x32xbf16, #tpu.memory_space<vmem>>, %arg7: memref<1x32xf32, #tpu.memory_space<vmem>>, %arg8: memref<1x32xf32, #tpu.memory_space<vmem>>, %arg9: memref<1x32xf32, #tpu.memory_space<vmem>>, %arg10: memref<32x128xbf16, #tpu.memory_space<vmem>>, %arg11: memref<1x128xf32, #tpu.memory_space<vmem>>, %arg12: memref<128x32xbf16, #tpu.memory_space<vmem>>, %arg13: memref<1x32xf32, #tpu.memory_space<vmem>>, %arg14: memref<2x8x32xf32, #tpu.memory_space<vmem>>) attributes {dimension_semantics = [#tpu.dimension_semantics<parallel>], iteration_bounds = array<i64: 1>, scalar_prefetch = 0 : i64, scratch_operands = 0 : i64, tpu.core_type = #tpu.core_type<tc>, window_params = [{transform_indices = @transform_0, window_bounds = array<i64: 2, 8, 32>}, {pipeline_mode = #tpu.pipeline_mode<synchronous>, transform_indices = @transform_1, window_bounds = array<i64: 1, 32>}, {pipeline_mode = #tpu.pipeline_mode<synchronous>, transform_indices = @transform_2, window_bounds = array<i64: 1, 32>}, {pipeline_mode = #tpu.pipeline_mode<synchronous>, transform_indices = @transform_3, window_bounds = array<i64: 32, 96>}, {pipeline_mode = #tpu.pipeline_mode<synchronous>, transform_indices = @transform_4, window_bounds = array<i64: 1, 96>}, {pipeline_mode = #tpu.pipeline_mode<synchronous>, transform_indices = @transform_5, window_bounds = array<i64: 32, 32>}, {pipeline_mode = #tpu.pipeline_mode<synchronous>, transform_indices = @transform_6, window_bounds = array<i64: 1, 32>}, {pipeline_mode = #tpu.pipeline_mode<synchronous>, transform_indices = @transform_7, window_bounds = array<i64: 1, 32>}, {pipeline_mode = #tpu.pipeline_mode<synchronous>, transform_indices = @transform_8, window_bounds = array<i64: 1, 32>}, {pipeline_mode = #tpu.pipeline_mode<synchronous>, transform_indices = @transform_9, window_bounds = array<i64: 32, 128>}, {pipeline_mode = #tpu.pipeline_mode<synchronous>, transform_indices = @transform_10, window_bounds = array<i64: 1, 128>}, {pipeline_mode = #tpu.pipeline_mode<synchronous>, transform_indices = @transform_11, window_bounds = array<i64: 128, 32>}, {pipeline_mode = #tpu.pipeline_mode<synchronous>, transform_indices = @transform_12, window_bounds = array<i64: 1, 32>}, {transform_indices = @transform_13, window_bounds = array<i64: 2, 8, 32>}]} {
    %c0 = arith.constant 0 : index
    %c0_0 = arith.constant 0 : index
    %c0_1 = arith.constant 0 : index
    %0 = vector.load %arg1[%c0, %c0_0, %c0_1] : memref<2x8x32xf32, #tpu.memory_space<vmem>>, vector<2x8x32xf32>
    %1 = vector.shape_cast %0 : vector<2x8x32xf32> to vector<16x32xf32>
    %c0_2 = arith.constant 0 : index
    %c0_3 = arith.constant 0 : index
    %2 = vector.load %arg2[%c0_2, %c0_3] : memref<1x32xf32, #tpu.memory_space<vmem>>, vector<1x32xf32>
    %c0_4 = arith.constant 0 : index
    %c0_5 = arith.constant 0 : index
    %3 = vector.load %arg3[%c0_4, %c0_5] : memref<1x32xf32, #tpu.memory_space<vmem>>, vector<1x32xf32>
    %cst = arith.constant dense<0.000000e+00> : vector<16xf32>
    %4 = vector.multi_reduction <add>, %1, %cst [1] : vector<16x32xf32> to vector<16xf32>
    %5 = vector.shape_cast %4 : vector<16xf32> to vector<16x1xf32>
    %cst_6 = arith.constant 3.200000e+01 : f32
    %6 = vector.broadcast %cst_6 : f32 to vector<16x1xf32>
    %7 = arith.divf %5, %6 : vector<16x1xf32>
    %8 = vector.broadcast %7 : vector<16x1xf32> to vector<16x32xf32>
    %9 = arith.subf %1, %8 : vector<16x32xf32>
    %10 = arith.mulf %9, %9 : vector<16x32xf32>
    %cst_7 = arith.constant dense<0.000000e+00> : vector<16xf32>
    %11 = vector.multi_reduction <add>, %10, %cst_7 [1] : vector<16x32xf32> to vector<16xf32>
    %12 = vector.shape_cast %11 : vector<16xf32> to vector<16x1xf32>
    %cst_8 = arith.constant 3.200000e+01 : f32
    %13 = vector.broadcast %cst_8 : f32 to vector<16x1xf32>
    %14 = arith.divf %12, %13 : vector<16x1xf32>
    %15 = vector.broadcast %7 : vector<16x1xf32> to vector<16x32xf32>
    %16 = arith.subf %1, %15 : vector<16x32xf32>
    %cst_9 = arith.constant 9.99999996E-13 : f32
    %17 = vector.broadcast %cst_9 : f32 to vector<16x1xf32>
    %18 = arith.addf %14, %17 : vector<16x1xf32>
    %19 = math.rsqrt %18 : vector<16x1xf32>
    %20 = vector.broadcast %19 : vector<16x1xf32> to vector<16x32xf32>
    %21 = arith.mulf %16, %20 : vector<16x32xf32>
    %22 = vector.broadcast %2 : vector<1x32xf32> to vector<16x32xf32>
    %23 = arith.mulf %22, %21 : vector<16x32xf32>
    %24 = vector.broadcast %3 : vector<1x32xf32> to vector<16x32xf32>
    %25 = arith.addf %23, %24 : vector<16x32xf32>
    %26 = arith.truncf %25 : vector<16x32xf32> to vector<16x32xbf16>
    %c0_10 = arith.constant 0 : index
    %c0_11 = arith.constant 0 : index
    %27 = vector.load %arg4[%c0_10, %c0_11] : memref<32x96xbf16, #tpu.memory_space<vmem>>, vector<32x96xbf16>
    %cst_12 = arith.constant dense<0.000000e+00> : vector<16x96xf32>
    %28 = tpu.matmul %26, %27, %cst_12 {dimension_numbers = #tpu.dot_dimension_numbers<[1], [0], [0], [1], [0, 0, 1, 1], [], []>} : vector<16x32xbf16>, vector<32x96xbf16>, vector<16x96xf32> -> vector<16x96xf32>
    %c0_13 = arith.constant 0 : index
    %c0_14 = arith.constant 0 : index
    %29 = vector.load %arg5[%c0_13, %c0_14] : memref<1x96xf32, #tpu.memory_space<vmem>>, vector<1x96xf32>
    %30 = vector.broadcast %29 : vector<1x96xf32> to vector<16x96xf32>
    %31 = arith.addf %28, %30 : vector<16x96xf32>
    %32 = vector.extract_strided_slice %31 {offsets = [0, 0], sizes = [16, 8], strides = [1, 1]} : vector<16x96xf32> to vector<16x8xf32>
    %33 = arith.truncf %32 : vector<16x8xf32> to vector<16x8xbf16>
    %34 = vector.shape_cast %33 : vector<16x8xbf16> to vector<2x8x8xbf16>
    %35 = vector.extract_strided_slice %31 {offsets = [0, 32], sizes = [16, 8], strides = [1, 1]} : vector<16x96xf32> to vector<16x8xf32>
    %36 = arith.truncf %35 : vector<16x8xf32> to vector<16x8xbf16>
    %37 = vector.shape_cast %36 : vector<16x8xbf16> to vector<2x8x8xbf16>
    %38 = vector.extract_strided_slice %31 {offsets = [0, 64], sizes = [16, 8], strides = [1, 1]} : vector<16x96xf32> to vector<16x8xf32>
    %39 = arith.truncf %38 : vector<16x8xf32> to vector<16x8xbf16>
    %40 = vector.shape_cast %39 : vector<16x8xbf16> to vector<2x8x8xbf16>
    "tpu.trace_start"() <{level = 10 : i32, message = "bqd,bkd->bqk"}> : () -> ()
    %cst_15 = arith.constant dense<0.000000e+00> : vector<2x8x8xf32>
    %41 = tpu.matmul %34, %37, %cst_15 {dimension_numbers = #tpu.dot_dimension_numbers<[2], [2], [1], [1], [0, 0, 0, 1, 1, 1], [0], [0]>} : vector<2x8x8xbf16>, vector<2x8x8xbf16>, vector<2x8x8xf32> -> vector<2x8x8xf32>
    "tpu.trace_stop"() : () -> ()
    %cst_16 = arith.constant dense<0xFF800000> : vector<2x8xf32>
    %42 = vector.multi_reduction <maximumf>, %41, %cst_16 [2] : vector<2x8x8xf32> to vector<2x8xf32>
    %43 = vector.shape_cast %42 : vector<2x8xf32> to vector<2x8x1xf32>
    %44 = vector.broadcast %43 : vector<2x8x1xf32> to vector<2x8x8xf32>
    %45 = arith.subf %41, %44 : vector<2x8x8xf32>
    %46 = math.exp %45 : vector<2x8x8xf32>
    %cst_17 = arith.constant dense<0.000000e+00> : vector<2x8xf32>
    %47 = vector.multi_reduction <add>, %46, %cst_17 [2] : vector<2x8x8xf32> to vector<2x8xf32>
    %48 = vector.shape_cast %47 : vector<2x8xf32> to vector<2x8x1xf32>
    %49 = vector.broadcast %48 : vector<2x8x1xf32> to vector<2x8x8xf32>
    %50 = arith.divf %46, %49 : vector<2x8x8xf32>
    %51 = arith.truncf %50 : vector<2x8x8xf32> to vector<2x8x8xbf16>
    "tpu.trace_start"() <{level = 10 : i32, message = "bqk,bkd->bqd"}> : () -> ()
    %cst_18 = arith.constant dense<0.000000e+00> : vector<2x8x8xf32>
    %52 = tpu.matmul %51, %40, %cst_18 {dimension_numbers = #tpu.dot_dimension_numbers<[2], [1], [1], [2], [0, 0, 0, 1, 1, 2], [0], [0]>} : vector<2x8x8xbf16>, vector<2x8x8xbf16>, vector<2x8x8xf32> -> vector<2x8x8xf32>
    "tpu.trace_stop"() : () -> ()
    %53 = vector.shape_cast %52 : vector<2x8x8xf32> to vector<16x8xf32>
    %54 = arith.truncf %53 : vector<16x8xf32> to vector<16x8xbf16>
    %55 = vector.extract_strided_slice %31 {offsets = [0, 8], sizes = [16, 8], strides = [1, 1]} : vector<16x96xf32> to vector<16x8xf32>
    %56 = arith.truncf %55 : vector<16x8xf32> to vector<16x8xbf16>
    %57 = vector.shape_cast %56 : vector<16x8xbf16> to vector<2x8x8xbf16>
    %58 = vector.extract_strided_slice %31 {offsets = [0, 40], sizes = [16, 8], strides = [1, 1]} : vector<16x96xf32> to vector<16x8xf32>
    %59 = arith.truncf %58 : vector<16x8xf32> to vector<16x8xbf16>
    %60 = vector.shape_cast %59 : vector<16x8xbf16> to vector<2x8x8xbf16>
    %61 = vector.extract_strided_slice %31 {offsets = [0, 72], sizes = [16, 8], strides = [1, 1]} : vector<16x96xf32> to vector<16x8xf32>
    %62 = arith.truncf %61 : vector<16x8xf32> to vector<16x8xbf16>
    %63 = vector.shape_cast %62 : vector<16x8xbf16> to vector<2x8x8xbf16>
    "tpu.trace_start"() <{level = 10 : i32, message = "bqd,bkd->bqk"}> : () -> ()
    %cst_19 = arith.constant dense<0.000000e+00> : vector<2x8x8xf32>
    %64 = tpu.matmul %57, %60, %cst_19 {dimension_numbers = #tpu.dot_dimension_numbers<[2], [2], [1], [1], [0, 0, 0, 1, 1, 1], [0], [0]>} : vector<2x8x8xbf16>, vector<2x8x8xbf16>, vector<2x8x8xf32> -> vector<2x8x8xf32>
    "tpu.trace_stop"() : () -> ()
    %cst_20 = arith.constant dense<0xFF800000> : vector<2x8xf32>
    %65 = vector.multi_reduction <maximumf>, %64, %cst_20 [2] : vector<2x8x8xf32> to vector<2x8xf32>
    %66 = vector.shape_cast %65 : vector<2x8xf32> to vector<2x8x1xf32>
    %67 = vector.broadcast %66 : vector<2x8x1xf32> to vector<2x8x8xf32>
    %68 = arith.subf %64, %67 : vector<2x8x8xf32>
    %69 = math.exp %68 : vector<2x8x8xf32>
    %cst_21 = arith.constant dense<0.000000e+00> : vector<2x8xf32>
    %70 = vector.multi_reduction <add>, %69, %cst_21 [2] : vector<2x8x8xf32> to vector<2x8xf32>
    %71 = vector.shape_cast %70 : vector<2x8xf32> to vector<2x8x1xf32>
    %72 = vector.broadcast %71 : vector<2x8x1xf32> to vector<2x8x8xf32>
    %73 = arith.divf %69, %72 : vector<2x8x8xf32>
    %74 = arith.truncf %73 : vector<2x8x8xf32> to vector<2x8x8xbf16>
    "tpu.trace_start"() <{level = 10 : i32, message = "bqk,bkd->bqd"}> : () -> ()
    %cst_22 = arith.constant dense<0.000000e+00> : vector<2x8x8xf32>
    %75 = tpu.matmul %74, %63, %cst_22 {dimension_numbers = #tpu.dot_dimension_numbers<[2], [1], [1], [2], [0, 0, 0, 1, 1, 2], [0], [0]>} : vector<2x8x8xbf16>, vector<2x8x8xbf16>, vector<2x8x8xf32> -> vector<2x8x8xf32>
    "tpu.trace_stop"() : () -> ()
    %76 = vector.shape_cast %75 : vector<2x8x8xf32> to vector<16x8xf32>
    %77 = arith.truncf %76 : vector<16x8xf32> to vector<16x8xbf16>
    %78 = vector.extract_strided_slice %31 {offsets = [0, 16], sizes = [16, 8], strides = [1, 1]} : vector<16x96xf32> to vector<16x8xf32>
    %79 = arith.truncf %78 : vector<16x8xf32> to vector<16x8xbf16>
    %80 = vector.shape_cast %79 : vector<16x8xbf16> to vector<2x8x8xbf16>
    %81 = vector.extract_strided_slice %31 {offsets = [0, 48], sizes = [16, 8], strides = [1, 1]} : vector<16x96xf32> to vector<16x8xf32>
    %82 = arith.truncf %81 : vector<16x8xf32> to vector<16x8xbf16>
    %83 = vector.shape_cast %82 : vector<16x8xbf16> to vector<2x8x8xbf16>
    %84 = vector.extract_strided_slice %31 {offsets = [0, 80], sizes = [16, 8], strides = [1, 1]} : vector<16x96xf32> to vector<16x8xf32>
    %85 = arith.truncf %84 : vector<16x8xf32> to vector<16x8xbf16>
    %86 = vector.shape_cast %85 : vector<16x8xbf16> to vector<2x8x8xbf16>
    "tpu.trace_start"() <{level = 10 : i32, message = "bqd,bkd->bqk"}> : () -> ()
    %cst_23 = arith.constant dense<0.000000e+00> : vector<2x8x8xf32>
    %87 = tpu.matmul %80, %83, %cst_23 {dimension_numbers = #tpu.dot_dimension_numbers<[2], [2], [1], [1], [0, 0, 0, 1, 1, 1], [0], [0]>} : vector<2x8x8xbf16>, vector<2x8x8xbf16>, vector<2x8x8xf32> -> vector<2x8x8xf32>
    "tpu.trace_stop"() : () -> ()
    %cst_24 = arith.constant dense<0xFF800000> : vector<2x8xf32>
    %88 = vector.multi_reduction <maximumf>, %87, %cst_24 [2] : vector<2x8x8xf32> to vector<2x8xf32>
    %89 = vector.shape_cast %88 : vector<2x8xf32> to vector<2x8x1xf32>
    %90 = vector.broadcast %89 : vector<2x8x1xf32> to vector<2x8x8xf32>
    %91 = arith.subf %87, %90 : vector<2x8x8xf32>
    %92 = math.exp %91 : vector<2x8x8xf32>
    %cst_25 = arith.constant dense<0.000000e+00> : vector<2x8xf32>
    %93 = vector.multi_reduction <add>, %92, %cst_25 [2] : vector<2x8x8xf32> to vector<2x8xf32>
    %94 = vector.shape_cast %93 : vector<2x8xf32> to vector<2x8x1xf32>
    %95 = vector.broadcast %94 : vector<2x8x1xf32> to vector<2x8x8xf32>
    %96 = arith.divf %92, %95 : vector<2x8x8xf32>
    %97 = arith.truncf %96 : vector<2x8x8xf32> to vector<2x8x8xbf16>
    "tpu.trace_start"() <{level = 10 : i32, message = "bqk,bkd->bqd"}> : () -> ()
    %cst_26 = arith.constant dense<0.000000e+00> : vector<2x8x8xf32>
    %98 = tpu.matmul %97, %86, %cst_26 {dimension_numbers = #tpu.dot_dimension_numbers<[2], [1], [1], [2], [0, 0, 0, 1, 1, 2], [0], [0]>} : vector<2x8x8xbf16>, vector<2x8x8xbf16>, vector<2x8x8xf32> -> vector<2x8x8xf32>
    "tpu.trace_stop"() : () -> ()
    %99 = vector.shape_cast %98 : vector<2x8x8xf32> to vector<16x8xf32>
    %100 = arith.truncf %99 : vector<16x8xf32> to vector<16x8xbf16>
    %101 = vector.extract_strided_slice %31 {offsets = [0, 24], sizes = [16, 8], strides = [1, 1]} : vector<16x96xf32> to vector<16x8xf32>
    %102 = arith.truncf %101 : vector<16x8xf32> to vector<16x8xbf16>
    %103 = vector.shape_cast %102 : vector<16x8xbf16> to vector<2x8x8xbf16>
    %104 = vector.extract_strided_slice %31 {offsets = [0, 56], sizes = [16, 8], strides = [1, 1]} : vector<16x96xf32> to vector<16x8xf32>
    %105 = arith.truncf %104 : vector<16x8xf32> to vector<16x8xbf16>
    %106 = vector.shape_cast %105 : vector<16x8xbf16> to vector<2x8x8xbf16>
    %107 = vector.extract_strided_slice %31 {offsets = [0, 88], sizes = [16, 8], strides = [1, 1]} : vector<16x96xf32> to vector<16x8xf32>
    %108 = arith.truncf %107 : vector<16x8xf32> to vector<16x8xbf16>
    %109 = vector.shape_cast %108 : vector<16x8xbf16> to vector<2x8x8xbf16>
    "tpu.trace_start"() <{level = 10 : i32, message = "bqd,bkd->bqk"}> : () -> ()
    %cst_27 = arith.constant dense<0.000000e+00> : vector<2x8x8xf32>
    %110 = tpu.matmul %103, %106, %cst_27 {dimension_numbers = #tpu.dot_dimension_numbers<[2], [2], [1], [1], [0, 0, 0, 1, 1, 1], [0], [0]>} : vector<2x8x8xbf16>, vector<2x8x8xbf16>, vector<2x8x8xf32> -> vector<2x8x8xf32>
    "tpu.trace_stop"() : () -> ()
    %cst_28 = arith.constant dense<0xFF800000> : vector<2x8xf32>
    %111 = vector.multi_reduction <maximumf>, %110, %cst_28 [2] : vector<2x8x8xf32> to vector<2x8xf32>
    %112 = vector.shape_cast %111 : vector<2x8xf32> to vector<2x8x1xf32>
    %113 = vector.broadcast %112 : vector<2x8x1xf32> to vector<2x8x8xf32>
    %114 = arith.subf %110, %113 : vector<2x8x8xf32>
    %115 = math.exp %114 : vector<2x8x8xf32>
    %cst_29 = arith.constant dense<0.000000e+00> : vector<2x8xf32>
    %116 = vector.multi_reduction <add>, %115, %cst_29 [2] : vector<2x8x8xf32> to vector<2x8xf32>
    %117 = vector.shape_cast %116 : vector<2x8xf32> to vector<2x8x1xf32>
    %118 = vector.broadcast %117 : vector<2x8x1xf32> to vector<2x8x8xf32>
    %119 = arith.divf %115, %118 : vector<2x8x8xf32>
    %120 = arith.truncf %119 : vector<2x8x8xf32> to vector<2x8x8xbf16>
    "tpu.trace_start"() <{level = 10 : i32, message = "bqk,bkd->bqd"}> : () -> ()
    %cst_30 = arith.constant dense<0.000000e+00> : vector<2x8x8xf32>
    %121 = tpu.matmul %120, %109, %cst_30 {dimension_numbers = #tpu.dot_dimension_numbers<[2], [1], [1], [2], [0, 0, 0, 1, 1, 2], [0], [0]>} : vector<2x8x8xbf16>, vector<2x8x8xbf16>, vector<2x8x8xf32> -> vector<2x8x8xf32>
    "tpu.trace_stop"() : () -> ()
    %122 = vector.shape_cast %121 : vector<2x8x8xf32> to vector<16x8xf32>
    %123 = arith.truncf %122 : vector<16x8xf32> to vector<16x8xbf16>
    %124 = tpu.concatenate %54, %77, %100, %123 in 1 : vector<16x8xbf16>, vector<16x8xbf16>, vector<16x8xbf16>, vector<16x8xbf16> -> vector<16x32xbf16>
    %c0_31 = arith.constant 0 : index
    %c0_32 = arith.constant 0 : index
    %125 = vector.load %arg6[%c0_31, %c0_32] : memref<32x32xbf16, #tpu.memory_space<vmem>>, vector<32x32xbf16>
    %cst_33 = arith.constant dense<0.000000e+00> : vector<16x32xf32>
    %126 = tpu.matmul %124, %125, %cst_33 {dimension_numbers = #tpu.dot_dimension_numbers<[1], [0], [0], [1], [0, 0, 1, 1], [], []>} : vector<16x32xbf16>, vector<32x32xbf16>, vector<16x32xf32> -> vector<16x32xf32>
    %c0_34 = arith.constant 0 : index
    %c0_35 = arith.constant 0 : index
    %127 = vector.load %arg7[%c0_34, %c0_35] : memref<1x32xf32, #tpu.memory_space<vmem>>, vector<1x32xf32>
    %128 = vector.broadcast %127 : vector<1x32xf32> to vector<16x32xf32>
    %129 = arith.addf %126, %128 : vector<16x32xf32>
    %130 = arith.addf %1, %129 : vector<16x32xf32>
    %c0_36 = arith.constant 0 : index
    %c0_37 = arith.constant 0 : index
    %131 = vector.load %arg8[%c0_36, %c0_37] : memref<1x32xf32, #tpu.memory_space<vmem>>, vector<1x32xf32>
    %c0_38 = arith.constant 0 : index
    %c0_39 = arith.constant 0 : index
    %132 = vector.load %arg9[%c0_38, %c0_39] : memref<1x32xf32, #tpu.memory_space<vmem>>, vector<1x32xf32>
    %cst_40 = arith.constant dense<0.000000e+00> : vector<16xf32>
    %133 = vector.multi_reduction <add>, %130, %cst_40 [1] : vector<16x32xf32> to vector<16xf32>
    %134 = vector.shape_cast %133 : vector<16xf32> to vector<16x1xf32>
    %cst_41 = arith.constant 3.200000e+01 : f32
    %135 = vector.broadcast %cst_41 : f32 to vector<16x1xf32>
    %136 = arith.divf %134, %135 : vector<16x1xf32>
    %137 = vector.broadcast %136 : vector<16x1xf32> to vector<16x32xf32>
    %138 = arith.subf %130, %137 : vector<16x32xf32>
    %139 = arith.mulf %138, %138 : vector<16x32xf32>
    %cst_42 = arith.constant dense<0.000000e+00> : vector<16xf32>
    %140 = vector.multi_reduction <add>, %139, %cst_42 [1] : vector<16x32xf32> to vector<16xf32>
    %141 = vector.shape_cast %140 : vector<16xf32> to vector<16x1xf32>
    %cst_43 = arith.constant 3.200000e+01 : f32
    %142 = vector.broadcast %cst_43 : f32 to vector<16x1xf32>
    %143 = arith.divf %141, %142 : vector<16x1xf32>
    %144 = vector.broadcast %136 : vector<16x1xf32> to vector<16x32xf32>
    %145 = arith.subf %130, %144 : vector<16x32xf32>
    %cst_44 = arith.constant 9.99999996E-13 : f32
    %146 = vector.broadcast %cst_44 : f32 to vector<16x1xf32>
    %147 = arith.addf %143, %146 : vector<16x1xf32>
    %148 = math.rsqrt %147 : vector<16x1xf32>
    %149 = vector.broadcast %148 : vector<16x1xf32> to vector<16x32xf32>
    %150 = arith.mulf %145, %149 : vector<16x32xf32>
    %151 = vector.broadcast %131 : vector<1x32xf32> to vector<16x32xf32>
    %152 = arith.mulf %151, %150 : vector<16x32xf32>
    %153 = vector.broadcast %132 : vector<1x32xf32> to vector<16x32xf32>
    %154 = arith.addf %152, %153 : vector<16x32xf32>
    %155 = arith.truncf %154 : vector<16x32xf32> to vector<16x32xbf16>
    %c0_45 = arith.constant 0 : index
    %c0_46 = arith.constant 0 : index
    %156 = vector.load %arg10[%c0_45, %c0_46] : memref<32x128xbf16, #tpu.memory_space<vmem>>, vector<32x128xbf16>
    %cst_47 = arith.constant dense<0.000000e+00> : vector<16x128xf32>
    %157 = tpu.matmul %155, %156, %cst_47 {dimension_numbers = #tpu.dot_dimension_numbers<[1], [0], [0], [1], [0, 0, 1, 1], [], []>} : vector<16x32xbf16>, vector<32x128xbf16>, vector<16x128xf32> -> vector<16x128xf32>
    %c0_48 = arith.constant 0 : index
    %c0_49 = arith.constant 0 : index
    %158 = vector.load %arg11[%c0_48, %c0_49] : memref<1x128xf32, #tpu.memory_space<vmem>>, vector<1x128xf32>
    %159 = vector.broadcast %158 : vector<1x128xf32> to vector<16x128xf32>
    %160 = arith.addf %157, %159 : vector<16x128xf32>
    %cst_50 = arith.constant 1.702000e+00 : f32
    %161 = vector.broadcast %cst_50 : f32 to vector<16x128xf32>
    %162 = arith.mulf %161, %160 : vector<16x128xf32>
    %163 = arith.negf %162 : vector<16x128xf32>
    %164 = math.exp %163 : vector<16x128xf32>
    %cst_51 = arith.constant 1.000000e+00 : f32
    %165 = vector.broadcast %cst_51 : f32 to vector<16x128xf32>
    %166 = arith.addf %165, %164 : vector<16x128xf32>
    %167 = arith.divf %165, %166 : vector<16x128xf32>
    %168 = arith.mulf %160, %167 : vector<16x128xf32>
    %169 = arith.truncf %168 : vector<16x128xf32> to vector<16x128xbf16>
    %c0_52 = arith.constant 0 : index
    %c0_53 = arith.constant 0 : index
    %170 = vector.load %arg12[%c0_52, %c0_53] : memref<128x32xbf16, #tpu.memory_space<vmem>>, vector<128x32xbf16>
    %cst_54 = arith.constant dense<0.000000e+00> : vector<16x32xf32>
    %171 = tpu.matmul %169, %170, %cst_54 {dimension_numbers = #tpu.dot_dimension_numbers<[1], [0], [0], [1], [0, 0, 1, 1], [], []>} : vector<16x128xbf16>, vector<128x32xbf16>, vector<16x32xf32> -> vector<16x32xf32>
    %c0_55 = arith.constant 0 : index
    %c0_56 = arith.constant 0 : index
    %172 = vector.load %arg13[%c0_55, %c0_56] : memref<1x32xf32, #tpu.memory_space<vmem>>, vector<1x32xf32>
    %173 = vector.broadcast %172 : vector<1x32xf32> to vector<16x32xf32>
    %174 = arith.addf %171, %173 : vector<16x32xf32>
    %175 = arith.addf %130, %174 : vector<16x32xf32>
    %176 = vector.shape_cast %175 : vector<16x32xf32> to vector<2x8x32xf32>
    %c0_57 = arith.constant 0 : index
    %c0_58 = arith.constant 0 : index
    %c0_59 = arith.constant 0 : index
    %177 = vector.load %arg14[%c0_57, %c0_58, %c0_59] : memref<2x8x32xf32, #tpu.memory_space<vmem>>, vector<2x8x32xf32>
    tpu.vector_store %arg14[%c0_57, %c0_58, %c0_59], %176 {strides = array<i32>} : memref<2x8x32xf32, #tpu.memory_space<vmem>>, vector<2x8x32xf32>,
    return
  }
  func.func @transform_0(%arg0: i32) -> (i32, i32, i32) {
    %c0_i32 = arith.constant 0 : i32
    %c0_i32_0 = arith.constant 0 : i32
    %c0_i32_1 = arith.constant 0 : i32
    return %arg0, %c0_i32, %c0_i32_0 : i32, i32, i32
  }
  func.func @transform_1(%arg0: i32) -> (i32, i32) {
    %c0_i32 = arith.constant 0 : i32
    %c0_i32_0 = arith.constant 0 : i32
    %c0_i32_1 = arith.constant 0 : i32
    return %c0_i32, %c0_i32_0 : i32, i32
  }
  func.func @transform_2(%arg0: i32) -> (i32, i32) {
    %c0_i32 = arith.constant 0 : i32
    %c0_i32_0 = arith.constant 0 : i32
    %c0_i32_1 = arith.constant 0 : i32
    return %c0_i32, %c0_i32_0 : i32, i32
  }
  func.func @transform_3(%arg0: i32) -> (i32, i32) {
    %c0_i32 = arith.constant 0 : i32
    %c0_i32_0 = arith.constant 0 : i32
    %c0_i32_1 = arith.constant 0 : i32
    return %c0_i32, %c0_i32_0 : i32, i32
  }
  func.func @transform_4(%arg0: i32) -> (i32, i32) {
    %c0_i32 = arith.constant 0 : i32
    %c0_i32_0 = arith.constant 0 : i32
    %c0_i32_1 = arith.constant 0 : i32
    return %c0_i32, %c0_i32_0 : i32, i32
  }
  func.func @transform_5(%arg0: i32) -> (i32, i32) {
    %c0_i32 = arith.constant 0 : i32
    %c0_i32_0 = arith.constant 0 : i32
    %c0_i32_1 = arith.constant 0 : i32
    return %c0_i32, %c0_i32_0 : i32, i32
  }
  func.func @transform_6(%arg0: i32) -> (i32, i32) {
    %c0_i32 = arith.constant 0 : i32
    %c0_i32_0 = arith.constant 0 : i32
    %c0_i32_1 = arith.constant 0 : i32
    return %c0_i32, %c0_i32_0 : i32, i32
  }
  func.func @transform_7(%arg0: i32) -> (i32, i32) {
    %c0_i32 = arith.constant 0 : i32
    %c0_i32_0 = arith.constant 0 : i32
    %c0_i32_1 = arith.constant 0 : i32
    return %c0_i32, %c0_i32_0 : i32, i32
  }
  func.func @transform_8(%arg0: i32) -> (i32, i32) {
    %c0_i32 = arith.constant 0 : i32
    %c0_i32_0 = arith.constant 0 : i32
    %c0_i32_1 = arith.constant 0 : i32
    return %c0_i32, %c0_i32_0 : i32, i32
  }
  func.func @transform_9(%arg0: i32) -> (i32, i32) {
    %c0_i32 = arith.constant 0 : i32
    %c0_i32_0 = arith.constant 0 : i32
    %c0_i32_1 = arith.constant 0 : i32
    return %c0_i32, %c0_i32_0 : i32, i32
  }
  func.func @transform_10(%arg0: i32) -> (i32, i32) {
    %c0_i32 = arith.constant 0 : i32
    %c0_i32_0 = arith.constant 0 : i32
    %c0_i32_1 = arith.constant 0 : i32
    return %c0_i32, %c0_i32_0 : i32, i32
  }
  func.func @transform_11(%arg0: i32) -> (i32, i32) {
    %c0_i32 = arith.constant 0 : i32
    %c0_i32_0 = arith.constant 0 : i32
    %c0_i32_1 = arith.constant 0 : i32
    return %c0_i32, %c0_i32_0 : i32, i32
  }
  func.func @transform_12(%arg0: i32) -> (i32, i32) {
    %c0_i32 = arith.constant 0 : i32
    %c0_i32_0 = arith.constant 0 : i32
    %c0_i32_1 = arith.constant 0 : i32
    return %c0_i32, %c0_i32_0 : i32, i32
  }
  func.func @transform_13(%arg0: i32) -> (i32, i32, i32) {
    %c0_i32 = arith.constant 0 : i32
    %c0_i32_0 = arith.constant 0 : i32
    %c0_i32_1 = arith.constant 0 : i32
    return %arg0, %c0_i32, %c0_i32_0 : i32, i32, i32
  }
}

</mosaic_0001>

<llo_original>
// kernel: tpu_custom_call.1
$region0: #{tpu_custom_call.1}
  #allocation0 [shape = 'u32[]', space=smem, size = 0x4, offset = 0x4, fixed_abs, tag = 'smem constant byte address 0x4 - core index']
  #allocation1 [shape = 'u32[144,128]{1,0:T(1,128)}', space=vmem, size = 0x12000, scoped, tag = 'internal scratch']
  %s0 = inlined_call_operand.vmem [shape: f32[2,8,32], index: 0, kind: input, shape index: {}]
  %s1 = inlined_call_operand.vmem [shape: f32[1,32], index: 1, kind: input, shape index: {}]
  %s2 = inlined_call_operand.vmem [shape: f32[1,32], index: 2, kind: input, shape index: {}]
  %s3 = inlined_call_operand.vmem [shape: bf16[32,96], index: 3, kind: input, shape index: {}]
  %s4 = inlined_call_operand.vmem [shape: f32[1,96], index: 4, kind: input, shape index: {}]
  %s5 = inlined_call_operand.vmem [shape: bf16[32,32], index: 5, kind: input, shape index: {}]
  %s6 = inlined_call_operand.vmem [shape: f32[1,32], index: 6, kind: input, shape index: {}]
  %s7 = inlined_call_operand.vmem [shape: f32[1,32], index: 7, kind: input, shape index: {}]
  %s8 = inlined_call_operand.vmem [shape: f32[1,32], index: 8, kind: input, shape index: {}]
  %s9 = inlined_call_operand.vmem [shape: bf16[32,128], index: 9, kind: input, shape index: {}]
  %s10 = inlined_call_operand.vmem [shape: f32[1,128], index: 10, kind: input, shape index: {}]
  %s11 = inlined_call_operand.vmem [shape: bf16[128,32], index: 11, kind: input, shape index: {}]
  %s12 = inlined_call_operand.vmem [shape: f32[1,32], index: 12, kind: input, shape index: {}]
  %s13 = inlined_call_operand.hbm [shape: f32[2,8,32], index: 13, kind: output, shape index: {}]
  %s14 = sld [smem:[#allocation0]]
  $region62: #{tpu_custom_call.1} parent=0
    _
  %s16 = ssub.s32 1, %s14
  %s17 = scalar_select 0, %s16, %s14
  $region1: #{tpu_custom_call.1} parent=0
    #allocation2 [shape = 'u8[8192]{0}', space=vmem, size = 0x2000, scoped, tag = 'output window, operand 0, single buffered']
    #allocation3 [shape = 's32[1]{0}', space=sflag, size = 0x4, scoped, tag = 'scoped memory for tpu_custom_call.1']
    %18 = vsyncpa [#allocation3], 0
    // Predicated region
    $region2: #{tpu_custom_call.1} parent=1 // pred_check
      _
    $region3: #{tpu_custom_call.1} parent=1 // pred_check_branch
      %20 = sbr.rel (0) target = $region5
    $region4: #{tpu_custom_call.1} parent=1 // pred_region
      _
    $region5: #{tpu_custom_call.1} parent=1 // pred_fallthru
      _
    // Predicated region
    $region6: #{tpu_custom_call.1} parent=1 // pred_check
      _
    $region7: #{tpu_custom_call.1} parent=1 // pred_check_branch
      %22 = sbr.rel (0) target = $region9
    $region8: #{tpu_custom_call.1} parent=1 // pred_region
      _
    $region9: #{tpu_custom_call.1} parent=1 // pred_fallthru
      _
    // Predicated region
    $region10: #{tpu_custom_call.1} parent=1 // pred_check
      _
    $region11: #{tpu_custom_call.1} parent=1 // pred_check_branch
      %24 = sbr.rel (0) target = $region13
    $region12: #{tpu_custom_call.1} parent=1 // pred_region
      _
    $region13: #{tpu_custom_call.1} parent=1 // pred_fallthru
      _
    // Predicated region
    $region14: #{tpu_custom_call.1} parent=1 // pred_check
      _
    $region15: #{tpu_custom_call.1} parent=1 // pred_check_branch
      %26 = sbr.rel (0) target = $region17
    $region16: #{tpu_custom_call.1} parent=1 // pred_region
      _
    $region17: #{tpu_custom_call.1} parent=1 // pred_fallthru
      _
    // Predicated region
    $region18: #{tpu_custom_call.1} parent=1 // pred_check
      _
    $region19: #{tpu_custom_call.1} parent=1 // pred_check_branch
      %28 = sbr.rel (0) target = $region21
    $region20: #{tpu_custom_call.1} parent=1 // pred_region
      _
    $region21: #{tpu_custom_call.1} parent=1 // pred_fallthru
      _
    // Predicated region
    $region22: #{tpu_custom_call.1} parent=1 // pred_check
      _
    $region23: #{tpu_custom_call.1} parent=1 // pred_check_branch
      %30 = sbr.rel (0) target = $region25
    $region24: #{tpu_custom_call.1} parent=1 // pred_region
      _
    $region25: #{tpu_custom_call.1} parent=1 // pred_fallthru
      _
    // Predicated region
    $region26: #{tpu_custom_call.1} parent=1 // pred_check
      _
    $region27: #{tpu_custom_call.1} parent=1 // pred_check_branch
      %32 = sbr.rel (0) target = $region29
    $region28: #{tpu_custom_call.1} parent=1 // pred_region
      _
    $region29: #{tpu_custom_call.1} parent=1 // pred_fallthru
      _
    // Predicated region
    $region30: #{tpu_custom_call.1} parent=1 // pred_check
      _
    $region31: #{tpu_custom_call.1} parent=1 // pred_check_branch
      %34 = sbr.rel (0) target = $region33
    $region32: #{tpu_custom_call.1} parent=1 // pred_region
      _
    $region33: #{tpu_custom_call.1} parent=1 // pred_fallthru
      _
    // Predicated region
    $region34: #{tpu_custom_call.1} parent=1 // pred_check
      _
    $region35: #{tpu_custom_call.1} parent=1 // pred_check_branch
      %36 = sbr.rel (0) target = $region37
    $region36: #{tpu_custom_call.1} parent=1 // pred_region
      _
    $region37: #{tpu_custom_call.1} parent=1 // pred_fallthru
      _
    // Predicated region
    $region38: #{tpu_custom_call.1} parent=1 // pred_check
      _
    $region39: #{tpu_custom_call.1} parent=1 // pred_check_branch
      %38 = sbr.rel (0) target = $region41
    $region40: #{tpu_custom_call.1} parent=1 // pred_region
      _
    $region41: #{tpu_custom_call.1} parent=1 // pred_fallthru
      _
    // Predicated region
    $region42: #{tpu_custom_call.1} parent=1 // pred_check
      _
    $region43: #{tpu_custom_call.1} parent=1 // pred_check_branch
      %40 = sbr.rel (0) target = $region45
    $region44: #{tpu_custom_call.1} parent=1 // pred_region
      _
    $region45: #{tpu_custom_call.1} parent=1 // pred_fallthru
      _
    // Predicated region
    $region46: #{tpu_custom_call.1} parent=1 // pred_check
      _
    $region47: #{tpu_custom_call.1} parent=1 // pred_check_branch
      %42 = sbr.rel (0) target = $region49
    $region48: #{tpu_custom_call.1} parent=1 // pred_region
      _
    $region49: #{tpu_custom_call.1} parent=1 // pred_fallthru
      _
    // Predicated region
    $region50: #{tpu_custom_call.1} parent=1 // pred_check
      _
    $region51: #{tpu_custom_call.1} parent=1 // pred_check_branch
      %44 = sbr.rel (0) target = $region53
    $region52: #{tpu_custom_call.1} parent=1 // pred_region
      _
    $region53: #{tpu_custom_call.1} parent=1 // pred_fallthru
      _
    %v46 = vld [vmem:[%s0] sm:$0xff]
    %v47 = vld [vmem:[%s0 + $0x8] sm:$0xff]
    %v48 = vld [vmem:[%s1] sm:$0x1]
    %v49 = vld [vmem:[%s2] sm:$0x1]
    %vm50 = vcmask 261120
    %v51 = vsel %vm50, %v46, 0.0
    %52 = vadd.xlane.f32.xlu0 %v51
    %v53 = vpop.xlane.xlu0 %52
    %v54 = vsel %vm50, %v47, 0.0
    %55 = vadd.xlane.f32.xlu0 %v54
    %v56 = vpop.xlane.xlu0 %55
    %v57 = vrcp.pop 32.0
    %v58 = vmul.f32 %v53, %v57
    %v59 = vmul.f32 %v56, %v57
    %v60 = vsub.f32 %v46, %v58
    %v61 = vsub.f32 %v47, %v59
    %v62 = vmul.f32 %v60, %v60
    %v63 = vmul.f32 %v61, %v61
    %v64 = vsel %vm50, %v62, 0.0
    %65 = vadd.xlane.f32.xlu0 %v64
    %v66 = vpop.xlane.xlu0 %65
    %v67 = vsel %vm50, %v63, 0.0
    %68 = vadd.xlane.f32.xlu0 %v67
    %v69 = vpop.xlane.xlu0 %68
    %v70 = vmul.f32 %v66, %v57
    %v71 = vmul.f32 %v69, %v57
    %v72 = vadd.f32 %v70, 1e-12
    %v73 = vadd.f32 %v71, 1e-12
    %v74 = vrsqrt.pop %v72
    %v75 = vrsqrt.pop %v73
    %v76 = vmul.f32 %v60, %v74
    %v77 = vmul.f32 %v61, %v75
    %v79 = vlaneseq
    %v80 = vshrl.u32 %v79, 7
    %v81 = vsub.s32 0, %v80
    %v82 = vrot.slane %v48, %v81
    %v84 = vmul.f32 %v82, %v76
    %v85 = vmul.f32 %v82, %v77
    %v87 = vlaneseq
    %v88 = vshrl.u32 %v87, 7
    %v89 = vsub.s32 0, %v88
    %v90 = vrot.slane %v49, %v89
    %v92 = vadd.f32 %v84, %v90
    %v93 = vadd.f32 %v85, %v90
    %v94 = vpack.c.bf16 %v93, %v92
    %v95 = vld [vmem:[%s3] sm:$0xf]
    %v96 = vld [vmem:[%s3 + $0x4] sm:$0xf]
    %v97 = vld [vmem:[%s3 + $0x8] sm:$0xf]
    %v98 = vld [vmem:[%s3 + $0xc] sm:$0xf]
    %v99 = vld [vmem:[%s4] sm:$0x1]
    %v101 = vlaneseq
    %v102 = vshrl.u32 %v101, 7
    %v103 = vsub.s32 0, %v102
    %v104 = vrot.slane %v99, %v103
    %v110 = vunpack.c.l.b16 %v95
    %v111 = vunpack.c.l.b16 %v96
    %v112 = vunpack.c.l.b16 %v97
    %v113 = vunpack.c.l.b16 %v98
    %v114 = vpack.c.b16 %v111, %v110
    %v115 = vpack.c.b16 %v113, %v112
    %v119 = vsel %vm50, %v94, 0
    %121 = vmatprep.subr.bf16.mxu0 0
    %122 = vmatpush1.bf16.msra.mxu0 0
    %123 = vmatprep.subr.bf16.mxu0 0
    %124 = vmatpush1.bf16.msra.mxu0 0
    %125 = vmatprep.subr.bf16.mxu0 0
    %126 = vmatpush1.bf16.msra.mxu0 0
    %127 = vmatprep.subr.bf16.mxu0 0
    %128 = vmatpush1.bf16.msra.mxu0 0
    %129 = vmatprep.subr.bf16.mxu0 0
    %130 = vmatpush1.bf16.msra.mxu0 0
    %131 = vmatprep.subr.bf16.mxu0 0
    %132 = vmatpush1.bf16.msra.mxu0 0
    %133 = vmatprep.subr.bf16.mxu0 0
    %134 = vmatpush1.bf16.msra.mxu0 %v115
    %135 = vmatprep.subr.bf16.mxu0 0
    %136 = vmatpush1.bf16.msra.mxu0 %v114
    %137 = vmatprep.subr.bf16.mxu0 0
    %138 = vmatpush2.bf16.msra.mxu0 0
    %139 = vmatprep.subr.bf16.mxu0 0
    %140 = vmatpush2.bf16.msra.mxu0 0
    %141 = vmatprep.subr.bf16.mxu0 0
    %142 = vmatpush2.bf16.msra.mxu0 0
    %143 = vmatprep.subr.bf16.mxu0 0
    %144 = vmatpush2.bf16.msra.mxu0 0
    %145 = vmatprep.subr.bf16.mxu0 0
    %146 = vmatpush2.bf16.msra.mxu0 0
    %147 = vmatprep.subr.bf16.mxu0 0
    %148 = vmatpush2.bf16.msra.mxu0 0
    %149 = vmatprep.subr.bf16.mxu0 0
    %150 = vmatpush2.bf16.msra.mxu0 0
    %151 = vmatprep.subr.bf16.mxu0 0
    %152 = vmatpush2.bf16.msra.mxu0 0
    %153 = vmatprep.mubr.bf16.mxu0 0
    %154 = vmatmul.mubr.bf16.gmra.mxu0 %v119
    %v155 = vpop.f32.mrf.mxu0
    %v156 = vadd.f32 %v104, %v155
    %v157 = vpop.f32.mrf.mxu0
    %v158 = vpop.f32.mrf.mxu0
    %v159 = vadd.f32 %v104, %v158
    %v160 = vpop.f32.mrf.mxu0
    %161 = vdwg.mxu0
    %v162 = vpack.c.bf16 %v159, %v156
    %v164 = vunpack.c.l.b16 %v162
    %v165 = vunpack.c.h.b16 %v162
    %v166 = vpack.c.b16 %v164, %v164
    %v167 = vpack.c.b16 %v165, %v165
    %168 = vrot.lane.b32.xlu0 %v166, 96
    %v169 = vpop.permute.xlu0 %168
    %vm170 = vcmask 64512
    %v172 = vsel %vm170, %v166, 0
    %v175 = vsel %vm170, %v169, 0
    %177 = vmatprep.subr.bf16.mxu0 0
    %178 = vmatpush1.bf16.xpose.msra.mxu0 0
    %179 = vmatprep.subr.bf16.mxu0 0
    %180 = vmatpush1.bf16.xpose.msra.mxu0 0
    %181 = vmatprep.subr.bf16.mxu0 0
    %182 = vmatpush1.bf16.xpose.msra.mxu0 0
    %183 = vmatprep.subr.bf16.mxu0 0
    %184 = vmatpush1.bf16.xpose.msra.mxu0 0
    %185 = vmatprep.subr.bf16.mxu0 0
    %186 = vmatpush1.bf16.xpose.msra.mxu0 0
    %187 = vmatprep.subr.bf16.mxu0 0
    %188 = vmatpush1.bf16.xpose.msra.mxu0 0
    %189 = vmatprep.subr.bf16.mxu0 0
    %190 = vmatpush1.bf16.xpose.msra.mxu0 0
    %191 = vmatprep.subr.bf16.mxu0 0
    %192 = vmatpush1.bf16.xpose.msra.mxu0 %v175
    %193 = vmatprep.subr.bf16.mxu0 0
    %194 = vmatpush2.bf16.xpose.msra.mxu0 0
    %195 = vmatprep.subr.bf16.mxu0 0
    %196 = vmatpush2.bf16.xpose.msra.mxu0 0
    %197 = vmatprep.subr.bf16.mxu0 0
    %198 = vmatpush2.bf16.xpose.msra.mxu0 0
    %199 = vmatprep.subr.bf16.mxu0 0
    %200 = vmatpush2.bf16.xpose.msra.mxu0 0
    %201 = vmatprep.subr.bf16.mxu0 0
    %202 = vmatpush2.bf16.xpose.msra.mxu0 0
    %203 = vmatprep.subr.bf16.mxu0 0
    %204 = vmatpush2.bf16.xpose.msra.mxu0 0
    %205 = vmatprep.subr.bf16.mxu0 0
    %206 = vmatpush2.bf16.xpose.msra.mxu0 0
    %207 = vmatprep.subr.bf16.mxu0 0
    %208 = vmatpush2.bf16.xpose.msra.mxu0 0
    %209 = vmatprep.mubr.bf16.mxu0 0
    %210 = vmatmul.mubr.bf16.gmra.mxu0 %v172
    %v211 = vpop.f32.mrf.mxu0
    %v212 = vadd.f32 0.0, %v211
    %v213 = vpop.f32.mrf.mxu0
    %v214 = vpop.f32.mrf.mxu0
    %v215 = vpop.f32.mrf.mxu0
    %216 = vdwg.mxu0
    %217 = vrot.lane.b32.xlu0 %v167, 96
    %v218 = vpop.permute.xlu0 %217
    %v220 = vsel %vm170, %v167, 0
    %v223 = vsel %vm170, %v218, 0
    %225 = vmatprep.subr.bf16.mxu0 0
    %226 = vmatpush1.bf16.xpose.msra.mxu0 0
    %227 = vmatprep.subr.bf16.mxu0 0
    %228 = vmatpush1.bf16.xpose.msra.mxu0 0
    %229 = vmatprep.subr.bf16.mxu0 0
    %230 = vmatpush1.bf16.xpose.msra.mxu0 0
    %231 = vmatprep.subr.bf16.mxu0 0
    %232 = vmatpush1.bf16.xpose.msra.mxu0 0
    %233 = vmatprep.subr.bf16.mxu0 0
    %234 = vmatpush1.bf16.xpose.msra.mxu0 0
    %235 = vmatprep.subr.bf16.mxu0 0
    %236 = vmatpush1.bf16.xpose.msra.mxu0 0
    %237 = vmatprep.subr.bf16.mxu0 0
    %238 = vmatpush1.bf16.xpose.msra.mxu0 0
    %239 = vmatprep.subr.bf16.mxu0 0
    %240 = vmatpush1.bf16.xpose.msra.mxu0 %v223
    %241 = vmatprep.subr.bf16.mxu0 0
    %242 = vmatpush2.bf16.xpose.msra.mxu0 0
    %243 = vmatprep.subr.bf16.mxu0 0
    %244 = vmatpush2.bf16.xpose.msra.mxu0 0
    %245 = vmatprep.subr.bf16.mxu0 0
    %246 = vmatpush2.bf16.xpose.msra.mxu0 0
    %247 = vmatprep.subr.bf16.mxu0 0
    %248 = vmatpush2.bf16.xpose.msra.mxu0 0
    %249 = vmatprep.subr.bf16.mxu0 0
    %250 = vmatpush2.bf16.xpose.msra.mxu0 0
    %251 = vmatprep.subr.bf16.mxu0 0
    %252 = vmatpush2.bf16.xpose.msra.mxu0 0
    %253 = vmatprep.subr.bf16.mxu0 0
    %254 = vmatpush2.bf16.xpose.msra.mxu0 0
    %255 = vmatprep.subr.bf16.mxu0 0
    %256 = vmatpush2.bf16.xpose.msra.mxu0 0
    %257 = vmatprep.mubr.bf16.mxu0 0
    %258 = vmatmul.mubr.bf16.gmra.mxu0 %v220
    %v259 = vpop.f32.mrf.mxu0
    %v260 = vadd.f32 0.0, %v259
    %v261 = vpop.f32.mrf.mxu0
    %v262 = vpop.f32.mrf.mxu0
    %v263 = vpop.f32.mrf.mxu0
    %264 = vdwg.mxu0
    %v265 = vsel %vm170, %v212, -inf
    %266 = vmax.xlane.f32.xlu0 %v265
    %v267 = vpop.xlane.xlu0 %266
    %v268 = vsel %vm170, %v260, -inf
    %269 = vmax.xlane.f32.xlu0 %v268
    %v270 = vpop.xlane.xlu0 %269
    %v271 = vsub.f32 %v212, %v267
    %v272 = vsub.f32 %v260, %v270
    %v273 = vmul.f32 %v271, 1.442695
    %v274 = vpow.pop %v273
    %v275 = vmul.f32 %v272, 1.442695
    %v276 = vpow.pop %v275
    %v277 = vsel %vm170, %v274, 0.0
    %278 = vadd.xlane.f32.xlu0 %v277
    %v279 = vpop.xlane.xlu0 %278
    %v280 = vsel %vm170, %v276, 0.0
    %281 = vadd.xlane.f32.xlu0 %v280
    %v282 = vpop.xlane.xlu0 %281
    %v283 = vrcp.pop %v279
    %v284 = vmul.f32 %v274, %v283
    %v285 = vrcp.pop %v282
    %v286 = vmul.f32 %v276, %v285
    %v287 = vpack.c.bf16 %v284, %v284
    %v288 = vpack.c.bf16 %v286, %v286
    %289 = vrot.lane.b32.xlu0 %v166, 64
    %v290 = vpop.permute.xlu0 %289
    %v292 = vsel %vm170, %v287, 0
    %vm294 = vcmask 1043456
    %v296 = vsel %vm294, %v290, 0
    %298 = vmatprep.subr.bf16.mxu0 0
    %299 = vmatpush1.bf16.msra.mxu0 0
    %300 = vmatprep.subr.bf16.mxu0 0
    %301 = vmatpush1.bf16.msra.mxu0 0
    %302 = vmatprep.subr.bf16.mxu0 0
    %303 = vmatpush1.bf16.msra.mxu0 0
    %304 = vmatprep.subr.bf16.mxu0 0
    %305 = vmatpush1.bf16.msra.mxu0 0
    %306 = vmatprep.subr.bf16.mxu0 0
    %307 = vmatpush1.bf16.msra.mxu0 0
    %308 = vmatprep.subr.bf16.mxu0 0
    %309 = vmatpush1.bf16.msra.mxu0 0
    %310 = vmatprep.subr.bf16.mxu0 0
    %311 = vmatpush1.bf16.msra.mxu0 0
    %312 = vmatprep.subr.bf16.mxu0 0
    %313 = vmatpush1.bf16.msra.mxu0 %v296
    %314 = vmatprep.subr.bf16.mxu0 0
    %315 = vmatpush2.bf16.msra.mxu0 0
    %316 = vmatprep.subr.bf16.mxu0 0
    %317 = vmatpush2.bf16.msra.mxu0 0
    %318 = vmatprep.subr.bf16.mxu0 0
    %319 = vmatpush2.bf16.msra.mxu0 0
    %320 = vmatprep.subr.bf16.mxu0 0
    %321 = vmatpush2.bf16.msra.mxu0 0
    %322 = vmatprep.subr.bf16.mxu0 0
    %323 = vmatpush2.bf16.msra.mxu0 0
    %324 = vmatprep.subr.bf16.mxu0 0
    %325 = vmatpush2.bf16.msra.mxu0 0
    %326 = vmatprep.subr.bf16.mxu0 0
    %327 = vmatpush2.bf16.msra.mxu0 0
    %328 = vmatprep.subr.bf16.mxu0 0
    %329 = vmatpush2.bf16.msra.mxu0 0
    %330 = vmatprep.mubr.bf16.mxu0 0
    %331 = vmatmul.mubr.bf16.gmra.mxu0 %v292
    %v332 = vpop.f32.mrf.mxu0
    %v333 = vadd.f32 0.0, %v332
    %v334 = vpop.f32.mrf.mxu0
    %v335 = vpop.f32.mrf.mxu0
    %v336 = vpop.f32.mrf.mxu0
    %337 = vdwg.mxu0
    %338 = vrot.lane.b32.xlu0 %v167, 64
    %v339 = vpop.permute.xlu0 %338
    %v341 = vsel %vm170, %v288, 0
    %v344 = vsel %vm294, %v339, 0
    %346 = vmatprep.subr.bf16.mxu0 0
    %347 = vmatpush1.bf16.msra.mxu0 0
    %348 = vmatprep.subr.bf16.mxu0 0
    %349 = vmatpush1.bf16.msra.mxu0 0
    %350 = vmatprep.subr.bf16.mxu0 0
    %351 = vmatpush1.bf16.msra.mxu0 0
    %352 = vmatprep.subr.bf16.mxu0 0
    %353 = vmatpush1.bf16.msra.mxu0 0
    %354 = vmatprep.subr.bf16.mxu0 0
    %355 = vmatpush1.bf16.msra.mxu0 0
    %356 = vmatprep.subr.bf16.mxu0 0
    %357 = vmatpush1.bf16.msra.mxu0 0
    %358 = vmatprep.subr.bf16.mxu0 0
    %359 = vmatpush1.bf16.msra.mxu0 0
    %360 = vmatprep.subr.bf16.mxu0 0
    %361 = vmatpush1.bf16.msra.mxu0 %v344
    %362 = vmatprep.subr.bf16.mxu0 0
    %363 = vmatpush2.bf16.msra.mxu0 0
    %364 = vmatprep.subr.bf16.mxu0 0
    %365 = vmatpush2.bf16.msra.mxu0 0
    %366 = vmatprep.subr.bf16.mxu0 0
    %367 = vmatpush2.bf16.msra.mxu0 0
    %368 = vmatprep.subr.bf16.mxu0 0
    %369 = vmatpush2.bf16.msra.mxu0 0
    %370 = vmatprep.subr.bf16.mxu0 0
    %371 = vmatpush2.bf16.msra.mxu0 0
    %372 = vmatprep.subr.bf16.mxu0 0
    %373 = vmatpush2.bf16.msra.mxu0 0
    %374 = vmatprep.subr.bf16.mxu0 0
    %375 = vmatpush2.bf16.msra.mxu0 0
    %376 = vmatprep.subr.bf16.mxu0 0
    %377 = vmatpush2.bf16.msra.mxu0 0
    %378 = vmatprep.mubr.bf16.mxu0 0
    %379 = vmatmul.mubr.bf16.gmra.mxu0 %v341
    %v380 = vpop.f32.mrf.mxu0
    %v381 = vadd.f32 0.0, %v380
    %v382 = vpop.f32.mrf.mxu0
    %v383 = vpop.f32.mrf.mxu0
    %v384 = vpop.f32.mrf.mxu0
    %385 = vdwg.mxu0
    %v386 = vpack.c.bf16 %v381, %v333
    %387 = vrot.lane.b32.xlu0 %v166, 120
    %v388 = vpop.permute.xlu0 %387
    %389 = vrot.lane.b32.xlu0 %v166, 88
    %v390 = vpop.permute.xlu0 %389
    %v392 = vsel %vm170, %v388, 0
    %v395 = vsel %vm170, %v390, 0
    %397 = vmatprep.subr.bf16.mxu0 0
    %398 = vmatpush1.bf16.xpose.msra.mxu0 0
    %399 = vmatprep.subr.bf16.mxu0 0
    %400 = vmatpush1.bf16.xpose.msra.mxu0 0
    %401 = vmatprep.subr.bf16.mxu0 0
    %402 = vmatpush1.bf16.xpose.msra.mxu0 0
    %403 = vmatprep.subr.bf16.mxu0 0
    %404 = vmatpush1.bf16.xpose.msra.mxu0 0
    %405 = vmatprep.subr.bf16.mxu0 0
    %406 = vmatpush1.bf16.xpose.msra.mxu0 0
    %407 = vmatprep.subr.bf16.mxu0 0
    %408 = vmatpush1.bf16.xpose.msra.mxu0 0
    %409 = vmatprep.subr.bf16.mxu0 0
    %410 = vmatpush1.bf16.xpose.msra.mxu0 0
    %411 = vmatprep.subr.bf16.mxu0 0
    %412 = vmatpush1.bf16.xpose.msra.mxu0 %v395
    %413 = vmatprep.subr.bf16.mxu0 0
    %414 = vmatpush2.bf16.xpose.msra.mxu0 0
    %415 = vmatprep.subr.bf16.mxu0 0
    %416 = vmatpush2.bf16.xpose.msra.mxu0 0
    %417 = vmatprep.subr.bf16.mxu0 0
    %418 = vmatpush2.bf16.xpose.msra.mxu0 0
    %419 = vmatprep.subr.bf16.mxu0 0
    %420 = vmatpush2.bf16.xpose.msra.mxu0 0
    %421 = vmatprep.subr.bf16.mxu0 0
    %422 = vmatpush2.bf16.xpose.msra.mxu0 0
    %423 = vmatprep.subr.bf16.mxu0 0
    %424 = vmatpush2.bf16.xpose.msra.mxu0 0
    %425 = vmatprep.subr.bf16.mxu0 0
    %426 = vmatpush2.bf16.xpose.msra.mxu0 0
    %427 = vmatprep.subr.bf16.mxu0 0
    %428 = vmatpush2.bf16.xpose.msra.mxu0 0
    %429 = vmatprep.mubr.bf16.mxu0 0
    %430 = vmatmul.mubr.bf16.gmra.mxu0 %v392
    %v431 = vpop.f32.mrf.mxu0
    %v432 = vadd.f32 0.0, %v431
    %v433 = vpop.f32.mrf.mxu0
    %v434 = vpop.f32.mrf.mxu0
    %v435 = vpop.f32.mrf.mxu0
    %436 = vdwg.mxu0
    %437 = vrot.lane.b32.xlu0 %v167, 120
    %v438 = vpop.permute.xlu0 %437
    %439 = vrot.lane.b32.xlu0 %v167, 88
    %v440 = vpop.permute.xlu0 %439
    %v442 = vsel %vm170, %v438, 0
    %v445 = vsel %vm170, %v440, 0
    %447 = vmatprep.subr.bf16.mxu0 0
    %448 = vmatpush1.bf16.xpose.msra.mxu0 0
    %449 = vmatprep.subr.bf16.mxu0 0
    %450 = vmatpush1.bf16.xpose.msra.mxu0 0
    %451 = vmatprep.subr.bf16.mxu0 0
    %452 = vmatpush1.bf16.xpose.msra.mxu0 0
    %453 = vmatprep.subr.bf16.mxu0 0
    %454 = vmatpush1.bf16.xpose.msra.mxu0 0
    %455 = vmatprep.subr.bf16.mxu0 0
    %456 = vmatpush1.bf16.xpose.msra.mxu0 0
    %457 = vmatprep.subr.bf16.mxu0 0
    %458 = vmatpush1.bf16.xpose.msra.mxu0 0
    %459 = vmatprep.subr.bf16.mxu0 0
    %460 = vmatpush1.bf16.xpose.msra.mxu0 0
    %461 = vmatprep.subr.bf16.mxu0 0
    %462 = vmatpush1.bf16.xpose.msra.mxu0 %v445
    %463 = vmatprep.subr.bf16.mxu0 0
    %464 = vmatpush2.bf16.xpose.msra.mxu0 0
    %465 = vmatprep.subr.bf16.mxu0 0
    %466 = vmatpush2.bf16.xpose.msra.mxu0 0
    %467 = vmatprep.subr.bf16.mxu0 0
    %468 = vmatpush2.bf16.xpose.msra.mxu0 0
    %469 = vmatprep.subr.bf16.mxu0 0
    %470 = vmatpush2.bf16.xpose.msra.mxu0 0
    %471 = vmatprep.subr.bf16.mxu0 0
    %472 = vmatpush2.bf16.xpose.msra.mxu0 0
    %473 = vmatprep.subr.bf16.mxu0 0
    %474 = vmatpush2.bf16.xpose.msra.mxu0 0
    %475 = vmatprep.subr.bf16.mxu0 0
    %476 = vmatpush2.bf16.xpose.msra.mxu0 0
    %477 = vmatprep.subr.bf16.mxu0 0
    %478 = vmatpush2.bf16.xpose.msra.mxu0 0
    %479 = vmatprep.mubr.bf16.mxu0 0
    %480 = vmatmul.mubr.bf16.gmra.mxu0 %v442
    %v481 = vpop.f32.mrf.mxu0
    %v482 = vadd.f32 0.0, %v481
    %v483 = vpop.f32.mrf.mxu0
    %v484 = vpop.f32.mrf.mxu0
    %v485 = vpop.f32.mrf.mxu0
    %486 = vdwg.mxu0
    %v487 = vsel %vm170, %v432, -inf
    %488 = vmax.xlane.f32.xlu0 %v487
    %v489 = vpop.xlane.xlu0 %488
    %v490 = vsel %vm170, %v482, -inf
    %491 = vmax.xlane.f32.xlu0 %v490
    %v492 = vpop.xlane.xlu0 %491
    %v493 = vsub.f32 %v432, %v489
    %v494 = vsub.f32 %v482, %v492
    %v495 = vmul.f32 %v493, 1.442695
    %v496 = vpow.pop %v495
    %v497 = vmul.f32 %v494, 1.442695
    %v498 = vpow.pop %v497
    %v499 = vsel %vm170, %v496, 0.0
    %500 = vadd.xlane.f32.xlu0 %v499
    %v501 = vpop.xlane.xlu0 %500
    %v502 = vsel %vm170, %v498, 0.0
    %503 = vadd.xlane.f32.xlu0 %v502
    %v504 = vpop.xlane.xlu0 %503
    %v505 = vrcp.pop %v501
    %v506 = vmul.f32 %v496, %v505
    %v507 = vrcp.pop %v504
    %v508 = vmul.f32 %v498, %v507
    %v509 = vpack.c.bf16 %v506, %v506
    %v510 = vpack.c.bf16 %v508, %v508
    %511 = vrot.lane.b32.xlu0 %v166, 56
    %v512 = vpop.permute.xlu0 %511
    %v514 = vsel %vm170, %v509, 0
    %v517 = vsel %vm294, %v512, 0
    %519 = vmatprep.subr.bf16.mxu0 0
    %520 = vmatpush1.bf16.msra.mxu0 0
    %521 = vmatprep.subr.bf16.mxu0 0
    %522 = vmatpush1.bf16.msra.mxu0 0
    %523 = vmatprep.subr.bf16.mxu0 0
    %524 = vmatpush1.bf16.msra.mxu0 0
    %525 = vmatprep.subr.bf16.mxu0 0
    %526 = vmatpush1.bf16.msra.mxu0 0
    %527 = vmatprep.subr.bf16.mxu0 0
    %528 = vmatpush1.bf16.msra.mxu0 0
    %529 = vmatprep.subr.bf16.mxu0 0
    %530 = vmatpush1.bf16.msra.mxu0 0
    %531 = vmatprep.subr.bf16.mxu0 0
    %532 = vmatpush1.bf16.msra.mxu0 0
    %533 = vmatprep.subr.bf16.mxu0 0
    %534 = vmatpush1.bf16.msra.mxu0 %v517
    %535 = vmatprep.subr.bf16.mxu0 0
    %536 = vmatpush2.bf16.msra.mxu0 0
    %537 = vmatprep.subr.bf16.mxu0 0
    %538 = vmatpush2.bf16.msra.mxu0 0
    %539 = vmatprep.subr.bf16.mxu0 0
    %540 = vmatpush2.bf16.msra.mxu0 0
    %541 = vmatprep.subr.bf16.mxu0 0
    %542 = vmatpush2.bf16.msra.mxu0 0
    %543 = vmatprep.subr.bf16.mxu0 0
    %544 = vmatpush2.bf16.msra.mxu0 0
    %545 = vmatprep.subr.bf16.mxu0 0
    %546 = vmatpush2.bf16.msra.mxu0 0
    %547 = vmatprep.subr.bf16.mxu0 0
    %548 = vmatpush2.bf16.msra.mxu0 0
    %549 = vmatprep.subr.bf16.mxu0 0
    %550 = vmatpush2.bf16.msra.mxu0 0
    %551 = vmatprep.mubr.bf16.mxu0 0
    %552 = vmatmul.mubr.bf16.gmra.mxu0 %v514
    %v553 = vpop.f32.mrf.mxu0
    %v554 = vadd.f32 0.0, %v553
    %v555 = vpop.f32.mrf.mxu0
    %v556 = vpop.f32.mrf.mxu0
    %v557 = vpop.f32.mrf.mxu0
    %558 = vdwg.mxu0
    %559 = vrot.lane.b32.xlu0 %v167, 56
    %v560 = vpop.permute.xlu0 %559
    %v562 = vsel %vm170, %v510, 0
    %v565 = vsel %vm294, %v560, 0
    %567 = vmatprep.subr.bf16.mxu0 0
    %568 = vmatpush1.bf16.msra.mxu0 0
    %569 = vmatprep.subr.bf16.mxu0 0
    %570 = vmatpush1.bf16.msra.mxu0 0
    %571 = vmatprep.subr.bf16.mxu0 0
    %572 = vmatpush1.bf16.msra.mxu0 0
    %573 = vmatprep.subr.bf16.mxu0 0
    %574 = vmatpush1.bf16.msra.mxu0 0
    %575 = vmatprep.subr.bf16.mxu0 0
    %576 = vmatpush1.bf16.msra.mxu0 0
    %577 = vmatprep.subr.bf16.mxu0 0
    %578 = vmatpush1.bf16.msra.mxu0 0
    %579 = vmatprep.subr.bf16.mxu0 0
    %580 = vmatpush1.bf16.msra.mxu0 0
    %581 = vmatprep.subr.bf16.mxu0 0
    %582 = vmatpush1.bf16.msra.mxu0 %v565
    %583 = vmatprep.subr.bf16.mxu0 0
    %584 = vmatpush2.bf16.msra.mxu0 0
    %585 = vmatprep.subr.bf16.mxu0 0
    %586 = vmatpush2.bf16.msra.mxu0 0
    %587 = vmatprep.subr.bf16.mxu0 0
    %588 = vmatpush2.bf16.msra.mxu0 0
    %589 = vmatprep.subr.bf16.mxu0 0
    %590 = vmatpush2.bf16.msra.mxu0 0
    %591 = vmatprep.subr.bf16.mxu0 0
    %592 = vmatpush2.bf16.msra.mxu0 0
    %593 = vmatprep.subr.bf16.mxu0 0
    %594 = vmatpush2.bf16.msra.mxu0 0
    %595 = vmatprep.subr.bf16.mxu0 0
    %596 = vmatpush2.bf16.msra.mxu0 0
    %597 = vmatprep.subr.bf16.mxu0 0
    %598 = vmatpush2.bf16.msra.mxu0 0
    %599 = vmatprep.mubr.bf16.mxu0 0
    %600 = vmatmul.mubr.bf16.gmra.mxu0 %v562
    %v601 = vpop.f32.mrf.mxu0
    %v602 = vadd.f32 0.0, %v601
    %v603 = vpop.f32.mrf.mxu0
    %v604 = vpop.f32.mrf.mxu0
    %v605 = vpop.f32.mrf.mxu0
    %606 = vdwg.mxu0
    %v607 = vpack.c.bf16 %v602, %v554
    %608 = vrot.lane.b32.xlu0 %v166, 112
    %v609 = vpop.permute.xlu0 %608
    %610 = vrot.lane.b32.xlu0 %v166, 80
    %v611 = vpop.permute.xlu0 %610
    %v613 = vsel %vm170, %v609, 0
    %v616 = vsel %vm170, %v611, 0
    %618 = vmatprep.subr.bf16.mxu0 0
    %619 = vmatpush1.bf16.xpose.msra.mxu0 0
    %620 = vmatprep.subr.bf16.mxu0 0
    %621 = vmatpush1.bf16.xpose.msra.mxu0 0
    %622 = vmatprep.subr.bf16.mxu0 0
    %623 = vmatpush1.bf16.xpose.msra.mxu0 0
    %624 = vmatprep.subr.bf16.mxu0 0
    %625 = vmatpush1.bf16.xpose.msra.mxu0 0
    %626 = vmatprep.subr.bf16.mxu0 0
    %627 = vmatpush1.bf16.xpose.msra.mxu0 0
    %628 = vmatprep.subr.bf16.mxu0 0
    %629 = vmatpush1.bf16.xpose.msra.mxu0 0
    %630 = vmatprep.subr.bf16.mxu0 0
    %631 = vmatpush1.bf16.xpose.msra.mxu0 0
    %632 = vmatprep.subr.bf16.mxu0 0
    %633 = vmatpush1.bf16.xpose.msra.mxu0 %v616
    %634 = vmatprep.subr.bf16.mxu0 0
    %635 = vmatpush2.bf16.xpose.msra.mxu0 0
    %636 = vmatprep.subr.bf16.mxu0 0
    %637 = vmatpush2.bf16.xpose.msra.mxu0 0
    %638 = vmatprep.subr.bf16.mxu0 0
    %639 = vmatpush2.bf16.xpose.msra.mxu0 0
    %640 = vmatprep.subr.bf16.mxu0 0
    %641 = vmatpush2.bf16.xpose.msra.mxu0 0
    %642 = vmatprep.subr.bf16.mxu0 0
    %643 = vmatpush2.bf16.xpose.msra.mxu0 0
    %644 = vmatprep.subr.bf16.mxu0 0
    %645 = vmatpush2.bf16.xpose.msra.mxu0 0
    %646 = vmatprep.subr.bf16.mxu0 0
    %647 = vmatpush2.bf16.xpose.msra.mxu0 0
    %648 = vmatprep.subr.bf16.mxu0 0
    %649 = vmatpush2.bf16.xpose.msra.mxu0 0
    %650 = vmatprep.mubr.bf16.mxu0 0
    %651 = vmatmul.mubr.bf16.gmra.mxu0 %v613
    %v652 = vpop.f32.mrf.mxu0
    %v653 = vadd.f32 0.0, %v652
    %v654 = vpop.f32.mrf.mxu0
    %v655 = vpop.f32.mrf.mxu0
    %v656 = vpop.f32.mrf.mxu0
    %657 = vdwg.mxu0
    %658 = vrot.lane.b32.xlu0 %v167, 112
    %v659 = vpop.permute.xlu0 %658
    %660 = vrot.lane.b32.xlu0 %v167, 80
    %v661 = vpop.permute.xlu0 %660
    %v663 = vsel %vm170, %v659, 0
    %v666 = vsel %vm170, %v661, 0
    %668 = vmatprep.subr.bf16.mxu0 0
    %669 = vmatpush1.bf16.xpose.msra.mxu0 0
    %670 = vmatprep.subr.bf16.mxu0 0
    %671 = vmatpush1.bf16.xpose.msra.mxu0 0
    %672 = vmatprep.subr.bf16.mxu0 0
    %673 = vmatpush1.bf16.xpose.msra.mxu0 0
    %674 = vmatprep.subr.bf16.mxu0 0
    %675 = vmatpush1.bf16.xpose.msra.mxu0 0
    %676 = vmatprep.subr.bf16.mxu0 0
    %677 = vmatpush1.bf16.xpose.msra.mxu0 0
    %678 = vmatprep.subr.bf16.mxu0 0
    %679 = vmatpush1.bf16.xpose.msra.mxu0 0
    %680 = vmatprep.subr.bf16.mxu0 0
    %681 = vmatpush1.bf16.xpose.msra.mxu0 0
    %682 = vmatprep.subr.bf16.mxu0 0
    %683 = vmatpush1.bf16.xpose.msra.mxu0 %v666
    %684 = vmatprep.subr.bf16.mxu0 0
    %685 = vmatpush2.bf16.xpose.msra.mxu0 0
    %686 = vmatprep.subr.bf16.mxu0 0
    %687 = vmatpush2.bf16.xpose.msra.mxu0 0
    %688 = vmatprep.subr.bf16.mxu0 0
    %689 = vmatpush2.bf16.xpose.msra.mxu0 0
    %690 = vmatprep.subr.bf16.mxu0 0
    %691 = vmatpush2.bf16.xpose.msra.mxu0 0
    %692 = vmatprep.subr.bf16.mxu0 0
    %693 = vmatpush2.bf16.xpose.msra.mxu0 0
    %694 = vmatprep.subr.bf16.mxu0 0
    %695 = vmatpush2.bf16.xpose.msra.mxu0 0
    %696 = vmatprep.subr.bf16.mxu0 0
    %697 = vmatpush2.bf16.xpose.msra.mxu0 0
    %698 = vmatprep.subr.bf16.mxu0 0
    %699 = vmatpush2.bf16.xpose.msra.mxu0 0
    %700 = vmatprep.mubr.bf16.mxu0 0
    %701 = vmatmul.mubr.bf16.gmra.mxu0 %v663
    %v702 = vpop.f32.mrf.mxu0
    %v703 = vadd.f32 0.0, %v702
    %v704 = vpop.f32.mrf.mxu0
    %v705 = vpop.f32.mrf.mxu0
    %v706 = vpop.f32.mrf.mxu0
    %707 = vdwg.mxu0
    %v708 = vsel %vm170, %v653, -inf
    %709 = vmax.xlane.f32.xlu0 %v708
    %v710 = vpop.xlane.xlu0 %709
    %v711 = vsel %vm170, %v703, -inf
    %712 = vmax.xlane.f32.xlu0 %v711
    %v713 = vpop.xlane.xlu0 %712
    %v714 = vsub.f32 %v653, %v710
    %v715 = vsub.f32 %v703, %v713
    %v716 = vmul.f32 %v714, 1.442695
    %v717 = vpow.pop %v716
    %v718 = vmul.f32 %v715, 1.442695
    %v719 = vpow.pop %v718
    %v720 = vsel %vm170, %v717, 0.0
    %721 = vadd.xlane.f32.xlu0 %v720
    %v722 = vpop.xlane.xlu0 %721
    %v723 = vsel %vm170, %v719, 0.0
    %724 = vadd.xlane.f32.xlu0 %v723
    %v725 = vpop.xlane.xlu0 %724
    %v726 = vrcp.pop %v722
    %v727 = vmul.f32 %v717, %v726
    %v728 = vrcp.pop %v725
    %v729 = vmul.f32 %v719, %v728
    %v730 = vpack.c.bf16 %v727, %v727
    %v731 = vpack.c.bf16 %v729, %v729
    %732 = vrot.lane.b32.xlu0 %v166, 48
    %v733 = vpop.permute.xlu0 %732
    %v735 = vsel %vm170, %v730, 0
    %v738 = vsel %vm294, %v733, 0
    %740 = vmatprep.subr.bf16.mxu0 0
    %741 = vmatpush1.bf16.msra.mxu0 0
    %742 = vmatprep.subr.bf16.mxu0 0
    %743 = vmatpush1.bf16.msra.mxu0 0
    %744 = vmatprep.subr.bf16.mxu0 0
    %745 = vmatpush1.bf16.msra.mxu0 0
    %746 = vmatprep.subr.bf16.mxu0 0
    %747 = vmatpush1.bf16.msra.mxu0 0
    %748 = vmatprep.subr.bf16.mxu0 0
    %749 = vmatpush1.bf16.msra.mxu0 0
    %750 = vmatprep.subr.bf16.mxu0 0
    %751 = vmatpush1.bf16.msra.mxu0 0
    %752 = vmatprep.subr.bf16.mxu0 0
    %753 = vmatpush1.bf16.msra.mxu0 0
    %754 = vmatprep.subr.bf16.mxu0 0
    %755 = vmatpush1.bf16.msra.mxu0 %v738
    %756 = vmatprep.subr.bf16.mxu0 0
    %757 = vmatpush2.bf16.msra.mxu0 0
    %758 = vmatprep.subr.bf16.mxu0 0
    %759 = vmatpush2.bf16.msra.mxu0 0
    %760 = vmatprep.subr.bf16.mxu0 0
    %761 = vmatpush2.bf16.msra.mxu0 0
    %762 = vmatprep.subr.bf16.mxu0 0
    %763 = vmatpush2.bf16.msra.mxu0 0
    %764 = vmatprep.subr.bf16.mxu0 0
    %765 = vmatpush2.bf16.msra.mxu0 0
    %766 = vmatprep.subr.bf16.mxu0 0
    %767 = vmatpush2.bf16.msra.mxu0 0
    %768 = vmatprep.subr.bf16.mxu0 0
    %769 = vmatpush2.bf16.msra.mxu0 0
    %770 = vmatprep.subr.bf16.mxu0 0
    %771 = vmatpush2.bf16.msra.mxu0 0
    %772 = vmatprep.mubr.bf16.mxu0 0
    %773 = vmatmul.mubr.bf16.gmra.mxu0 %v735
    %v774 = vpop.f32.mrf.mxu0
    %v775 = vadd.f32 0.0, %v774
    %v776 = vpop.f32.mrf.mxu0
    %v777 = vpop.f32.mrf.mxu0
    %v778 = vpop.f32.mrf.mxu0
    %779 = vdwg.mxu0
    %780 = vrot.lane.b32.xlu0 %v167, 48
    %v781 = vpop.permute.xlu0 %780
    %v783 = vsel %vm170, %v731, 0
    %v786 = vsel %vm294, %v781, 0
    %788 = vmatprep.subr.bf16.mxu0 0
    %789 = vmatpush1.bf16.msra.mxu0 0
    %790 = vmatprep.subr.bf16.mxu0 0
    %791 = vmatpush1.bf16.msra.mxu0 0
    %792 = vmatprep.subr.bf16.mxu0 0
    %793 = vmatpush1.bf16.msra.mxu0 0
    %794 = vmatprep.subr.bf16.mxu0 0
    %795 = vmatpush1.bf16.msra.mxu0 0
    %796 = vmatprep.subr.bf16.mxu0 0
    %797 = vmatpush1.bf16.msra.mxu0 0
    %798 = vmatprep.subr.bf16.mxu0 0
    %799 = vmatpush1.bf16.msra.mxu0 0
    %800 = vmatprep.subr.bf16.mxu0 0
    %801 = vmatpush1.bf16.msra.mxu0 0
    %802 = vmatprep.subr.bf16.mxu0 0
    %803 = vmatpush1.bf16.msra.mxu0 %v786
    %804 = vmatprep.subr.bf16.mxu0 0
    %805 = vmatpush2.bf16.msra.mxu0 0
    %806 = vmatprep.subr.bf16.mxu0 0
    %807 = vmatpush2.bf16.msra.mxu0 0
    %808 = vmatprep.subr.bf16.mxu0 0
    %809 = vmatpush2.bf16.msra.mxu0 0
    %810 = vmatprep.subr.bf16.mxu0 0
    %811 = vmatpush2.bf16.msra.mxu0 0
    %812 = vmatprep.subr.bf16.mxu0 0
    %813 = vmatpush2.bf16.msra.mxu0 0
    %814 = vmatprep.subr.bf16.mxu0 0
    %815 = vmatpush2.bf16.msra.mxu0 0
    %816 = vmatprep.subr.bf16.mxu0 0
    %817 = vmatpush2.bf16.msra.mxu0 0
    %818 = vmatprep.subr.bf16.mxu0 0
    %819 = vmatpush2.bf16.msra.mxu0 0
    %820 = vmatprep.mubr.bf16.mxu0 0
    %821 = vmatmul.mubr.bf16.gmra.mxu0 %v783
    %v822 = vpop.f32.mrf.mxu0
    %v823 = vadd.f32 0.0, %v822
    %v824 = vpop.f32.mrf.mxu0
    %v825 = vpop.f32.mrf.mxu0
    %v826 = vpop.f32.mrf.mxu0
    %827 = vdwg.mxu0
    %v828 = vpack.c.bf16 %v823, %v775
    %829 = vrot.lane.b32.xlu0 %v166, 104
    %v830 = vpop.permute.xlu0 %829
    %831 = vrot.lane.b32.xlu0 %v166, 72
    %v832 = vpop.permute.xlu0 %831
    %v834 = vsel %vm170, %v830, 0
    %v837 = vsel %vm170, %v832, 0
    %839 = vmatprep.subr.bf16.mxu0 0
    %840 = vmatpush1.bf16.xpose.msra.mxu0 0
    %841 = vmatprep.subr.bf16.mxu0 0
    %842 = vmatpush1.bf16.xpose.msra.mxu0 0
    %843 = vmatprep.subr.bf16.mxu0 0
    %844 = vmatpush1.bf16.xpose.msra.mxu0 0
    %845 = vmatprep.subr.bf16.mxu0 0
    %846 = vmatpush1.bf16.xpose.msra.mxu0 0
    %847 = vmatprep.subr.bf16.mxu0 0
    %848 = vmatpush1.bf16.xpose.msra.mxu0 0
    %849 = vmatprep.subr.bf16.mxu0 0
    %850 = vmatpush1.bf16.xpose.msra.mxu0 0
    %851 = vmatprep.subr.bf16.mxu0 0
    %852 = vmatpush1.bf16.xpose.msra.mxu0 0
    %853 = vmatprep.subr.bf16.mxu0 0
    %854 = vmatpush1.bf16.xpose.msra.mxu0 %v837
    %855 = vmatprep.subr.bf16.mxu0 0
    %856 = vmatpush2.bf16.xpose.msra.mxu0 0
    %857 = vmatprep.subr.bf16.mxu0 0
    %858 = vmatpush2.bf16.xpose.msra.mxu0 0
    %859 = vmatprep.subr.bf16.mxu0 0
    %860 = vmatpush2.bf16.xpose.msra.mxu0 0
    %861 = vmatprep.subr.bf16.mxu0 0
    %862 = vmatpush2.bf16.xpose.msra.mxu0 0
    %863 = vmatprep.subr.bf16.mxu0 0
    %864 = vmatpush2.bf16.xpose.msra.mxu0 0
    %865 = vmatprep.subr.bf16.mxu0 0
    %866 = vmatpush2.bf16.xpose.msra.mxu0 0
    %867 = vmatprep.subr.bf16.mxu0 0
    %868 = vmatpush2.bf16.xpose.msra.mxu0 0
    %869 = vmatprep.subr.bf16.mxu0 0
    %870 = vmatpush2.bf16.xpose.msra.mxu0 0
    %871 = vmatprep.mubr.bf16.mxu0 0
    %872 = vmatmul.mubr.bf16.gmra.mxu0 %v834
    %v873 = vpop.f32.mrf.mxu0
    %v874 = vadd.f32 0.0, %v873
    %v875 = vpop.f32.mrf.mxu0
    %v876 = vpop.f32.mrf.mxu0
    %v877 = vpop.f32.mrf.mxu0
    %878 = vdwg.mxu0
    %879 = vrot.lane.b32.xlu0 %v167, 104
    %v880 = vpop.permute.xlu0 %879
    %881 = vrot.lane.b32.xlu0 %v167, 72
    %v882 = vpop.permute.xlu0 %881
    %v884 = vsel %vm170, %v880, 0
    %v887 = vsel %vm170, %v882, 0
    %889 = vmatprep.subr.bf16.mxu0 0
    %890 = vmatpush1.bf16.xpose.msra.mxu0 0
    %891 = vmatprep.subr.bf16.mxu0 0
    %892 = vmatpush1.bf16.xpose.msra.mxu0 0
    %893 = vmatprep.subr.bf16.mxu0 0
    %894 = vmatpush1.bf16.xpose.msra.mxu0 0
    %895 = vmatprep.subr.bf16.mxu0 0
    %896 = vmatpush1.bf16.xpose.msra.mxu0 0
    %897 = vmatprep.subr.bf16.mxu0 0
    %898 = vmatpush1.bf16.xpose.msra.mxu0 0
    %899 = vmatprep.subr.bf16.mxu0 0
    %900 = vmatpush1.bf16.xpose.msra.mxu0 0
    %901 = vmatprep.subr.bf16.mxu0 0
    %902 = vmatpush1.bf16.xpose.msra.mxu0 0
    %903 = vmatprep.subr.bf16.mxu0 0
    %904 = vmatpush1.bf16.xpose.msra.mxu0 %v887
    %905 = vmatprep.subr.bf16.mxu0 0
    %906 = vmatpush2.bf16.xpose.msra.mxu0 0
    %907 = vmatprep.subr.bf16.mxu0 0
    %908 = vmatpush2.bf16.xpose.msra.mxu0 0
    %909 = vmatprep.subr.bf16.mxu0 0
    %910 = vmatpush2.bf16.xpose.msra.mxu0 0
    %911 = vmatprep.subr.bf16.mxu0 0
    %912 = vmatpush2.bf16.xpose.msra.mxu0 0
    %913 = vmatprep.subr.bf16.mxu0 0
    %914 = vmatpush2.bf16.xpose.msra.mxu0 0
    %915 = vmatprep.subr.bf16.mxu0 0
    %916 = vmatpush2.bf16.xpose.msra.mxu0 0
    %917 = vmatprep.subr.bf16.mxu0 0
    %918 = vmatpush2.bf16.xpose.msra.mxu0 0
    %919 = vmatprep.subr.bf16.mxu0 0
    %920 = vmatpush2.bf16.xpose.msra.mxu0 0
    %921 = vmatprep.mubr.bf16.mxu0 0
    %922 = vmatmul.mubr.bf16.gmra.mxu0 %v884
    %v923 = vpop.f32.mrf.mxu0
    %v924 = vadd.f32 0.0, %v923
    %v925 = vpop.f32.mrf.mxu0
    %v926 = vpop.f32.mrf.mxu0
    %v927 = vpop.f32.mrf.mxu0
    %928 = vdwg.mxu0
    %v929 = vsel %vm170, %v874, -inf
    %930 = vmax.xlane.f32.xlu0 %v929
    %v931 = vpop.xlane.xlu0 %930
    %v932 = vsel %vm170, %v924, -inf
    %933 = vmax.xlane.f32.xlu0 %v932
    %v934 = vpop.xlane.xlu0 %933
    %v935 = vsub.f32 %v874, %v931
    %v936 = vsub.f32 %v924, %v934
    %v937 = vmul.f32 %v935, 1.442695
    %v938 = vpow.pop %v937
    %v939 = vmul.f32 %v936, 1.442695
    %v940 = vpow.pop %v939
    %v941 = vsel %vm170, %v938, 0.0
    %942 = vadd.xlane.f32.xlu0 %v941
    %v943 = vpop.xlane.xlu0 %942
    %v944 = vsel %vm170, %v940, 0.0
    %945 = vadd.xlane.f32.xlu0 %v944
    %v946 = vpop.xlane.xlu0 %945
    %v947 = vrcp.pop %v943
    %v948 = vmul.f32 %v938, %v947
    %v949 = vrcp.pop %v946
    %v950 = vmul.f32 %v940, %v949
    %v951 = vpack.c.bf16 %v948, %v948
    %v952 = vpack.c.bf16 %v950, %v950
    %953 = vrot.lane.b32.xlu0 %v166, 40
    %v954 = vpop.permute.xlu0 %953
    %v956 = vsel %vm170, %v951, 0
    %v959 = vsel %vm294, %v954, 0
    %961 = vmatprep.subr.bf16.mxu0 0
    %962 = vmatpush1.bf16.msra.mxu0 0
    %963 = vmatprep.subr.bf16.mxu0 0
    %964 = vmatpush1.bf16.msra.mxu0 0
    %965 = vmatprep.subr.bf16.mxu0 0
    %966 = vmatpush1.bf16.msra.mxu0 0
    %967 = vmatprep.subr.bf16.mxu0 0
    %968 = vmatpush1.bf16.msra.mxu0 0
    %969 = vmatprep.subr.bf16.mxu0 0
    %970 = vmatpush1.bf16.msra.mxu0 0
    %971 = vmatprep.subr.bf16.mxu0 0
    %972 = vmatpush1.bf16.msra.mxu0 0
    %973 = vmatprep.subr.bf16.mxu0 0
    %974 = vmatpush1.bf16.msra.mxu0 0
    %975 = vmatprep.subr.bf16.mxu0 0
    %976 = vmatpush1.bf16.msra.mxu0 %v959
    %977 = vmatprep.subr.bf16.mxu0 0
    %978 = vmatpush2.bf16.msra.mxu0 0
    %979 = vmatprep.subr.bf16.mxu0 0
    %980 = vmatpush2.bf16.msra.mxu0 0
    %981 = vmatprep.subr.bf16.mxu0 0
    %982 = vmatpush2.bf16.msra.mxu0 0
    %983 = vmatprep.subr.bf16.mxu0 0
    %984 = vmatpush2.bf16.msra.mxu0 0
    %985 = vmatprep.subr.bf16.mxu0 0
    %986 = vmatpush2.bf16.msra.mxu0 0
    %987 = vmatprep.subr.bf16.mxu0 0
    %988 = vmatpush2.bf16.msra.mxu0 0
    %989 = vmatprep.subr.bf16.mxu0 0
    %990 = vmatpush2.bf16.msra.mxu0 0
    %991 = vmatprep.subr.bf16.mxu0 0
    %992 = vmatpush2.bf16.msra.mxu0 0
    %993 = vmatprep.mubr.bf16.mxu0 0
    %994 = vmatmul.mubr.bf16.gmra.mxu0 %v956
    %v995 = vpop.f32.mrf.mxu0
    %v996 = vadd.f32 0.0, %v995
    %v997 = vpop.f32.mrf.mxu0
    %v998 = vpop.f32.mrf.mxu0
    %v999 = vpop.f32.mrf.mxu0
    %1000 = vdwg.mxu0
    %1001 = vrot.lane.b32.xlu0 %v167, 40
    %v1002 = vpop.permute.xlu0 %1001
    %v1004 = vsel %vm170, %v952, 0
    %v1007 = vsel %vm294, %v1002, 0
    %1009 = vmatprep.subr.bf16.mxu0 0
    %1010 = vmatpush1.bf16.msra.mxu0 0
    %1011 = vmatprep.subr.bf16.mxu0 0
    %1012 = vmatpush1.bf16.msra.mxu0 0
    %1013 = vmatprep.subr.bf16.mxu0 0
    %1014 = vmatpush1.bf16.msra.mxu0 0
    %1015 = vmatprep.subr.bf16.mxu0 0
    %1016 = vmatpush1.bf16.msra.mxu0 0
    %1017 = vmatprep.subr.bf16.mxu0 0
    %1018 = vmatpush1.bf16.msra.mxu0 0
    %1019 = vmatprep.subr.bf16.mxu0 0
    %1020 = vmatpush1.bf16.msra.mxu0 0
    %1021 = vmatprep.subr.bf16.mxu0 0
    %1022 = vmatpush1.bf16.msra.mxu0 0
    %1023 = vmatprep.subr.bf16.mxu0 0
    %1024 = vmatpush1.bf16.msra.mxu0 %v1007
    %1025 = vmatprep.subr.bf16.mxu0 0
    %1026 = vmatpush2.bf16.msra.mxu0 0
    %1027 = vmatprep.subr.bf16.mxu0 0
    %1028 = vmatpush2.bf16.msra.mxu0 0
    %1029 = vmatprep.subr.bf16.mxu0 0
    %1030 = vmatpush2.bf16.msra.mxu0 0
    %1031 = vmatprep.subr.bf16.mxu0 0
    %1032 = vmatpush2.bf16.msra.mxu0 0
    %1033 = vmatprep.subr.bf16.mxu0 0
    %1034 = vmatpush2.bf16.msra.mxu0 0
    %1035 = vmatprep.subr.bf16.mxu0 0
    %1036 = vmatpush2.bf16.msra.mxu0 0
    %1037 = vmatprep.subr.bf16.mxu0 0
    %1038 = vmatpush2.bf16.msra.mxu0 0
    %1039 = vmatprep.subr.bf16.mxu0 0
    %1040 = vmatpush2.bf16.msra.mxu0 0
    %1041 = vmatprep.mubr.bf16.mxu0 0
    %1042 = vmatmul.mubr.bf16.gmra.mxu0 %v1004
    %v1043 = vpop.f32.mrf.mxu0
    %v1044 = vadd.f32 0.0, %v1043
    %v1045 = vpop.f32.mrf.mxu0
    %v1046 = vpop.f32.mrf.mxu0
    %v1047 = vpop.f32.mrf.mxu0
    %1048 = vdwg.mxu0
    %v1049 = vpack.c.bf16 %v1044, %v996
    %1051 = vrot.lane.b32.xlu0 %v607, 8
    %v1052 = vpop.permute.xlu0 %1051
    %1054 = vrot.lane.b32.xlu0 %v828, 16
    %v1055 = vpop.permute.xlu0 %1054
    %1057 = vrot.lane.b32.xlu0 %v1049, 24
    %v1058 = vpop.permute.xlu0 %1057
    %v1061 = vsel %vm170, %v386, %v1052
    %vm1062 = vcmask 130048
    %v1064 = vsel %vm1062, %v1061, %v1055
    %vm1065 = vcmask 195584
    %v1067 = vsel %vm1065, %v1064, %v1058
    %v1068 = vld [vmem:[%s5] sm:$0xf]
    %v1069 = vld [vmem:[%s5 + $0x4] sm:$0xf]
    %v1070 = vld [vmem:[%s5 + $0x8] sm:$0xf]
    %v1071 = vld [vmem:[%s5 + $0xc] sm:$0xf]
    %v1072 = vld [vmem:[%s6] sm:$0x1]
    %v1074 = vlaneseq
    %v1075 = vshrl.u32 %v1074, 7
    %v1076 = vsub.s32 0, %v1075
    %v1077 = vrot.slane %v1072, %v1076
    %v1083 = vunpack.c.l.b16 %v1068
    %v1084 = vunpack.c.l.b16 %v1069
    %v1085 = vunpack.c.l.b16 %v1070
    %v1086 = vunpack.c.l.b16 %v1071
    %v1087 = vpack.c.b16 %v1084, %v1083
    %v1088 = vpack.c.b16 %v1086, %v1085
    %v1091 = vsel %vm50, %v1067, 0
    %1093 = vmatprep.subr.bf16.mxu0 0
    %1094 = vmatpush1.bf16.msra.mxu0 0
    %1095 = vmatprep.subr.bf16.mxu0 0
    %1096 = vmatpush1.bf16.msra.mxu0 0
    %1097 = vmatprep.subr.bf16.mxu0 0
    %1098 = vmatpush1.bf16.msra.mxu0 0
    %1099 = vmatprep.subr.bf16.mxu0 0
    %1100 = vmatpush1.bf16.msra.mxu0 0
    %1101 = vmatprep.subr.bf16.mxu0 0
    %1102 = vmatpush1.bf16.msra.mxu0 0
    %1103 = vmatprep.subr.bf16.mxu0 0
    %1104 = vmatpush1.bf16.msra.mxu0 0
    %1105 = vmatprep.subr.bf16.mxu0 0
    %1106 = vmatpush1.bf16.msra.mxu0 %v1088
    %1107 = vmatprep.subr.bf16.mxu0 0
    %1108 = vmatpush1.bf16.msra.mxu0 %v1087
    %1109 = vmatprep.subr.bf16.mxu0 0
    %1110 = vmatpush2.bf16.msra.mxu0 0
    %1111 = vmatprep.subr.bf16.mxu0 0
    %1112 = vmatpush2.bf16.msra.mxu0 0
    %1113 = vmatprep.subr.bf16.mxu0 0
    %1114 = vmatpush2.bf16.msra.mxu0 0
    %1115 = vmatprep.subr.bf16.mxu0 0
    %1116 = vmatpush2.bf16.msra.mxu0 0
    %1117 = vmatprep.subr.bf16.mxu0 0
    %1118 = vmatpush2.bf16.msra.mxu0 0
    %1119 = vmatprep.subr.bf16.mxu0 0
    %1120 = vmatpush2.bf16.msra.mxu0 0
    %1121 = vmatprep.subr.bf16.mxu0 0
    %1122 = vmatpush2.bf16.msra.mxu0 0
    %1123 = vmatprep.subr.bf16.mxu0 0
    %1124 = vmatpush2.bf16.msra.mxu0 0
    %1125 = vmatprep.mubr.bf16.mxu0 0
    %1126 = vmatmul.mubr.bf16.gmra.mxu0 %v1091
    %v1127 = vpop.f32.mrf.mxu0
    %v1128 = vadd.f32 %v1077, %v1127
    %v1129 = vpop.f32.mrf.mxu0
    %v1130 = vpop.f32.mrf.mxu0
    %v1131 = vadd.f32 %v1077, %v1130
    %v1132 = vpop.f32.mrf.mxu0
    %1133 = vdwg.mxu0
    %v1134 = vadd.f32 %v46, %v1128
    %v1135 = vadd.f32 %v47, %v1131
    %v1136 = vld [vmem:[%s7] sm:$0x1]
    %v1137 = vld [vmem:[%s8] sm:$0x1]
    %v1138 = vsel %vm50, %v1134, 0.0
    %1139 = vadd.xlane.f32.xlu0 %v1138
    %v1140 = vpop.xlane.xlu0 %1139
    %v1141 = vsel %vm50, %v1135, 0.0
    %1142 = vadd.xlane.f32.xlu0 %v1141
    %v1143 = vpop.xlane.xlu0 %1142
    %v1144 = vmul.f32 %v1140, %v57
    %v1145 = vmul.f32 %v1143, %v57
    %v1146 = vsub.f32 %v1134, %v1144
    %v1147 = vsub.f32 %v1135, %v1145
    %v1148 = vmul.f32 %v1146, %v1146
    %v1149 = vmul.f32 %v1147, %v1147
    %v1150 = vsel %vm50, %v1148, 0.0
    %1151 = vadd.xlane.f32.xlu0 %v1150
    %v1152 = vpop.xlane.xlu0 %1151
    %v1153 = vsel %vm50, %v1149, 0.0
    %1154 = vadd.xlane.f32.xlu0 %v1153
    %v1155 = vpop.xlane.xlu0 %1154
    %v1156 = vmul.f32 %v1152, %v57
    %v1157 = vmul.f32 %v1155, %v57
    %v1158 = vadd.f32 %v1156, 1e-12
    %v1159 = vadd.f32 %v1157, 1e-12
    %v1160 = vrsqrt.pop %v1158
    %v1161 = vrsqrt.pop %v1159
    %v1162 = vmul.f32 %v1146, %v1160
    %v1163 = vmul.f32 %v1147, %v1161
    %v1165 = vlaneseq
    %v1166 = vshrl.u32 %v1165, 7
    %v1167 = vsub.s32 0, %v1166
    %v1168 = vrot.slane %v1136, %v1167
    %v1170 = vmul.f32 %v1168, %v1162
    %v1171 = vmul.f32 %v1168, %v1163
    %v1173 = vlaneseq
    %v1174 = vshrl.u32 %v1173, 7
    %v1175 = vsub.s32 0, %v1174
    %v1176 = vrot.slane %v1137, %v1175
    %v1178 = vadd.f32 %v1170, %v1176
    %v1179 = vadd.f32 %v1171, %v1176
    %v1180 = vpack.c.bf16 %v1179, %v1178
    %v1181 = vld [vmem:[%s9] sm:$0xf]
    %v1182 = vld [vmem:[%s9 + $0x4] sm:$0xf]
    %v1183 = vld [vmem:[%s9 + $0x8] sm:$0xf]
    %v1184 = vld [vmem:[%s9 + $0xc] sm:$0xf]
    %v1185 = vld [vmem:[%s10] sm:$0x1]
    %v1187 = vlaneseq
    %v1188 = vshrl.u32 %v1187, 7
    %v1189 = vsub.s32 0, %v1188
    %v1190 = vrot.slane %v1185, %v1189
    %v1196 = vunpack.c.l.b16 %v1181
    %v1197 = vunpack.c.l.b16 %v1182
    %v1198 = vunpack.c.l.b16 %v1183
    %v1199 = vunpack.c.l.b16 %v1184
    %v1200 = vpack.c.b16 %v1197, %v1196
    %v1201 = vpack.c.b16 %v1199, %v1198
    %v1205 = vsel %vm50, %v1180, 0
    %1207 = vmatprep.subr.bf16.mxu0 0
    %1208 = vmatpush1.bf16.msra.mxu0 0
    %1209 = vmatprep.subr.bf16.mxu0 0
    %1210 = vmatpush1.bf16.msra.mxu0 0
    %1211 = vmatprep.subr.bf16.mxu0 0
    %1212 = vmatpush1.bf16.msra.mxu0 0
    %1213 = vmatprep.subr.bf16.mxu0 0
    %1214 = vmatpush1.bf16.msra.mxu0 0
    %1215 = vmatprep.subr.bf16.mxu0 0
    %1216 = vmatpush1.bf16.msra.mxu0 0
    %1217 = vmatprep.subr.bf16.mxu0 0
    %1218 = vmatpush1.bf16.msra.mxu0 0
    %1219 = vmatprep.subr.bf16.mxu0 0
    %1220 = vmatpush1.bf16.msra.mxu0 %v1201
    %1221 = vmatprep.subr.bf16.mxu0 0
    %1222 = vmatpush1.bf16.msra.mxu0 %v1200
    %1223 = vmatprep.subr.bf16.mxu0 0
    %1224 = vmatpush2.bf16.msra.mxu0 0
    %1225 = vmatprep.subr.bf16.mxu0 0
    %1226 = vmatpush2.bf16.msra.mxu0 0
    %1227 = vmatprep.subr.bf16.mxu0 0
    %1228 = vmatpush2.bf16.msra.mxu0 0
    %1229 = vmatprep.subr.bf16.mxu0 0
    %1230 = vmatpush2.bf16.msra.mxu0 0
    %1231 = vmatprep.subr.bf16.mxu0 0
    %1232 = vmatpush2.bf16.msra.mxu0 0
    %1233 = vmatprep.subr.bf16.mxu0 0
    %1234 = vmatpush2.bf16.msra.mxu0 0
    %1235 = vmatprep.subr.bf16.mxu0 0
    %1236 = vmatpush2.bf16.msra.mxu0 0
    %1237 = vmatprep.subr.bf16.mxu0 0
    %1238 = vmatpush2.bf16.msra.mxu0 0
    %1239 = vmatprep.mubr.bf16.mxu0 0
    %1240 = vmatmul.mubr.bf16.gmra.mxu0 %v1205
    %v1241 = vpop.f32.mrf.mxu0
    %v1242 = vadd.f32 %v1190, %v1241
    %v1243 = vpop.f32.mrf.mxu0
    %v1244 = vpop.f32.mrf.mxu0
    %v1245 = vadd.f32 %v1190, %v1244
    %v1246 = vpop.f32.mrf.mxu0
    %1247 = vdwg.mxu0
    %v1248 = vmul.f32 %v1242, 1.702
    %v1249 = vmul.f32 %v1245, 1.702
    %v1250 = vxor.u32 %v1248, 2147483648
    %v1251 = vxor.u32 %v1249, 2147483648
    %v1252 = vmul.f32 %v1250, 1.442695
    %v1253 = vpow.pop %v1252
    %v1254 = vmul.f32 %v1251, 1.442695
    %v1255 = vpow.pop %v1254
    %v1256 = vadd.f32 %v1253, 1.0
    %v1257 = vadd.f32 %v1255, 1.0
    %v1258 = vrcp.pop %v1256
    %v1259 = vmul.f32 1.0, %v1258
    %v1260 = vrcp.pop %v1257
    %v1261 = vmul.f32 1.0, %v1260
    %v1262 = vmul.f32 %v1242, %v1259
    %v1263 = vmul.f32 %v1245, %v1261
    %v1264 = vpack.c.bf16 %v1263, %v1262
    %v1265 = vld [vmem:[%s11] sm:$0xf]
    %v1266 = vld [vmem:[%s11 + $0x4] sm:$0xf]
    %v1267 = vld [vmem:[%s11 + $0x8] sm:$0xf]
    %v1268 = vld [vmem:[%s11 + $0xc] sm:$0xf]
    %v1269 = vld [vmem:[%s11 + $0x10] sm:$0xf]
    %v1270 = vld [vmem:[%s11 + $0x14] sm:$0xf]
    %v1271 = vld [vmem:[%s11 + $0x18] sm:$0xf]
    %v1272 = vld [vmem:[%s11 + $0x1c] sm:$0xf]
    %v1273 = vld [vmem:[%s11 + $0x20] sm:$0xf]
    %v1274 = vld [vmem:[%s11 + $0x24] sm:$0xf]
    %v1275 = vld [vmem:[%s11 + $0x28] sm:$0xf]
    %v1276 = vld [vmem:[%s11 + $0x2c] sm:$0xf]
    %v1277 = vld [vmem:[%s11 + $0x30] sm:$0xf]
    %v1278 = vld [vmem:[%s11 + $0x34] sm:$0xf]
    %v1279 = vld [vmem:[%s11 + $0x38] sm:$0xf]
    %v1280 = vld [vmem:[%s11 + $0x3c] sm:$0xf]
    %v1281 = vld [vmem:[%s12] sm:$0x1]
    %v1283 = vlaneseq
    %v1284 = vshrl.u32 %v1283, 7
    %v1285 = vsub.s32 0, %v1284
    %v1286 = vrot.slane %v1281, %v1285
    %v1304 = vunpack.c.l.b16 %v1265
    %v1305 = vunpack.c.l.b16 %v1266
    %v1306 = vunpack.c.l.b16 %v1267
    %v1307 = vunpack.c.l.b16 %v1268
    %v1308 = vunpack.c.l.b16 %v1269
    %v1309 = vunpack.c.l.b16 %v1270
    %v1310 = vunpack.c.l.b16 %v1271
    %v1311 = vunpack.c.l.b16 %v1272
    %v1312 = vunpack.c.l.b16 %v1273
    %v1313 = vunpack.c.l.b16 %v1274
    %v1314 = vunpack.c.l.b16 %v1275
    %v1315 = vunpack.c.l.b16 %v1276
    %v1316 = vunpack.c.l.b16 %v1277
    %v1317 = vunpack.c.l.b16 %v1278
    %v1318 = vunpack.c.l.b16 %v1279
    %v1319 = vunpack.c.l.b16 %v1280
    %v1320 = vpack.c.b16 %v1305, %v1304
    %v1321 = vpack.c.b16 %v1307, %v1306
    %v1322 = vpack.c.b16 %v1309, %v1308
    %v1323 = vpack.c.b16 %v1311, %v1310
    %v1324 = vpack.c.b16 %v1313, %v1312
    %v1325 = vpack.c.b16 %v1315, %v1314
    %v1326 = vpack.c.b16 %v1317, %v1316
    %v1327 = vpack.c.b16 %v1319, %v1318
    %1336 = vmatprep.subr.bf16.mxu0 0
    %1337 = vmatpush1.bf16.msra.mxu0 %v1327
    %1338 = vmatprep.subr.bf16.mxu0 0
    %1339 = vmatpush1.bf16.msra.mxu0 %v1326
    %1340 = vmatprep.subr.bf16.mxu0 0
    %1341 = vmatpush1.bf16.msra.mxu0 %v1325
    %1342 = vmatprep.subr.bf16.mxu0 0
    %1343 = vmatpush1.bf16.msra.mxu0 %v1324
    %1344 = vmatprep.subr.bf16.mxu0 0
    %1345 = vmatpush1.bf16.msra.mxu0 %v1323
    %1346 = vmatprep.subr.bf16.mxu0 0
    %1347 = vmatpush1.bf16.msra.mxu0 %v1322
    %1348 = vmatprep.subr.bf16.mxu0 0
    %1349 = vmatpush1.bf16.msra.mxu0 %v1321
    %1350 = vmatprep.subr.bf16.mxu0 0
    %1351 = vmatpush1.bf16.msra.mxu0 %v1320
    %1352 = vmatprep.subr.bf16.mxu0 0
    %1353 = vmatpush2.bf16.msra.mxu0 0
    %1354 = vmatprep.subr.bf16.mxu0 0
    %1355 = vmatpush2.bf16.msra.mxu0 0
    %1356 = vmatprep.subr.bf16.mxu0 0
    %1357 = vmatpush2.bf16.msra.mxu0 0
    %1358 = vmatprep.subr.bf16.mxu0 0
    %1359 = vmatpush2.bf16.msra.mxu0 0
    %1360 = vmatprep.subr.bf16.mxu0 0
    %1361 = vmatpush2.bf16.msra.mxu0 0
    %1362 = vmatprep.subr.bf16.mxu0 0
    %1363 = vmatpush2.bf16.msra.mxu0 0
    %1364 = vmatprep.subr.bf16.mxu0 0
    %1365 = vmatpush2.bf16.msra.mxu0 0
    %1366 = vmatprep.subr.bf16.mxu0 0
    %1367 = vmatpush2.bf16.msra.mxu0 0
    %1368 = vmatprep.mubr.bf16.mxu0 0
    %1369 = vmatmul.mubr.bf16.gmra.mxu0 %v1264
    %v1370 = vpop.f32.mrf.mxu0
    %v1371 = vadd.f32 %v1286, %v1370
    %v1372 = vpop.f32.mrf.mxu0
    %v1373 = vpop.f32.mrf.mxu0
    %v1374 = vadd.f32 %v1286, %v1373
    %v1375 = vpop.f32.mrf.mxu0
    %1376 = vdwg.mxu0
    %v1377 = vadd.f32 %v1134, %v1371
    %v1378 = vadd.f32 %v1135, %v1374
    %1379 = vst.msk [vmem:[#allocation2] sm:$0xff] %vm50, %v1377
    %1380 = vst.msk [vmem:[#allocation2 + $0x8] sm:$0xff] %vm50, %v1378
    // Predicated region
    $region54: #{tpu_custom_call.1} parent=1 // pred_check
      _
    $region55: #{tpu_custom_call.1} parent=1 // pred_check_branch
      %1382 = sbr.rel (0) target = $region57
    $region56: #{tpu_custom_call.1} parent=1 // pred_region
      %s1384 = ssub.s32 256, 256
      %1385 = vsyncadd [#allocation3], %s1384
      %s1386 = sshll.u32 [#allocation2], 4
      %s1387 = int_to_ptr.vmem [resolvable:$true] %s1386
      %1392 = dma.vmem_to_hbm [thread:$0]  %s1387, 256, %s13, [#allocation3], 128, 128, 8
    $region57: #{tpu_custom_call.1} parent=1 // pred_fallthru
      _
    // Predicated region
    $region58: #{tpu_custom_call.1} parent=1 // pred_check
      _
    $region59: #{tpu_custom_call.1} parent=1 // pred_check_branch
      %1394 = sbr.rel (0) target = $region61
    $region60: #{tpu_custom_call.1} parent=1 // pred_region
      %1395 = dma.done [#allocation3], 256
    $region61: #{tpu_custom_call.1} parent=1 // pred_fallthru
      _
    %1396 = vsyncpa [#allocation3], 1

</llo_original>
